<compile_context>
chip_gen: v5e
topology: v5e:2x2
jax: 0.10.0
libtpu: 0.0.40
codegen_flags: <defaults>
</compile_context>

<pallas_src>
import jax
import jax.numpy as jnp
from jax import lax
from jax.experimental import pallas as pl
from jax.experimental.pallas import tpu as pltpu


# ----------------------------------------------------------------------------
# Kernel: one grid step == one batch element.
# ----------------------------------------------------------------------------
def _rel_mha_kernel(x_ref, bias_ref, wqkv_ref, bu_ref, bv_ref, relt_ref,
                    wo_ref, out_ref):
    T = x_ref.shape[1]
    H, E = bu_ref.shape
    HE = H * E
    W = relt_ref.shape[1]            # lane-padded rel-pos width (>= 2T-1)

    x = x_ref[0]                     # (T, M)   bf16
    bias = bias_ref[0]               # (1, T)   f32 additive key mask (0 / -1e30)
    rel_t = relt_ref[...]            # (E, W)   bf16
    bu = bu_ref[...]                 # (H, E)   f32 (pre-scaled by 1/sqrt(E))
    bv = bv_ref[...]                 # (H, E)   f32 (pre-scaled by 1/sqrt(E))

    # fused Q/K/V projection: one MXU matmul, bf16 operands, f32 accumulate.
    qkv = jnp.dot(x, wqkv_ref[...], preferred_element_type=jnp.float32)

    # Transformer-XL skew: row i of the (T, W) rel-score matrix must be shifted
    # LEFT by (T-1-i).  Precompute per-row bit selectors for a barrel shifter.
    row = lax.broadcasted_iota(jnp.int32, (T, 1), 0)
    amt = (T - 1) - row
    nbits = (T - 1).bit_length()
    take_bit = [((amt >> b) & 1) != 0 for b in range(nbits)]          # (T,1) bool
    zero_pad = [jnp.zeros((T, 1 << b), jnp.float32) for b in range(nbits)]

    head_outs = []
    for h in range(H):               # static unroll: scores/softmax only (H small)
        lo = h * E
        q_h = qkv[:, lo:lo + E]                       # (T, E) f32 (pre-scaled)
        k_h = qkv[:, HE + lo:HE + lo + E]             # (T, E)
        v_h = qkv[:, 2 * HE + lo:2 * HE + lo + E]     # (T, E)

        # content term: (q + bu) @ k^T on the MXU (no explicit transpose)
        qbu = (q_h + bu[h:h + 1, :]).astype(jnp.bfloat16)
        content = lax.dot_general(
            qbu, k_h.astype(jnp.bfloat16), (((1,), (1,)), ((), ())),
            preferred_element_type=jnp.float32)        # (T, T)

        # relative-position term: one MXU matmul against the (E, W) table ...
        qbv = (q_h + bv[h:h + 1, :]).astype(jnp.bfloat16)
        s = jnp.dot(qbv, rel_t, preferred_element_type=jnp.float32)   # (T, W)
        # ... then the skew: left-shift row i by (T-1-i), zero fill.  Wrapped /
        # dropped data can never reach the first T columns because W >= 2T-1.
        for b in range(nbits):
            step = 1 << b
            shifted = jnp.concatenate([s[:, step:], zero_pad[b]], axis=1)
            s = jnp.where(take_bit[b], shifted, s)
        pos = s[:, :T]                                  # (T, T)

        # masked softmax over keys (f32); finite -1e30 bias => no NaN rows.
        logits = content + pos + bias
        mx = jnp.max(logits, axis=-1, keepdims=True)
        ex = jnp.exp(logits - mx)
        attn = ex * pl.reciprocal(jnp.sum(ex, axis=-1, keepdims=True),
                                  approx=True)
        # TODO(synk): attention dropout omitted (eval / identity semantics).

        head_outs.append(
            jnp.dot(attn.astype(jnp.bfloat16), v_h.astype(jnp.bfloat16),
                    preferred_element_type=jnp.float32))               # (T, E)

    # single fused output projection: (T, H*E) @ (H*E, Mpad) -> lane-dense store
    o_slab = jnp.concatenate(head_outs, axis=1).astype(jnp.bfloat16)
    out = jnp.dot(o_slab, wo_ref[...], preferred_element_type=jnp.float32)
    out_ref[0] = out.astype(out_ref.dtype)


# ----------------------------------------------------------------------------
# Glue: sinusoidal relative-position table (RelativePositionalEmbedding init)
# ----------------------------------------------------------------------------
def make_rel_pos_table(max_len, n_embed):
    pos = jnp.concatenate([
        jnp.arange(-(max_len // 2), 0, dtype=jnp.float32),
        jnp.arange(max_len // 2, dtype=jnp.float32),
    ])
    denom = 10000.0 ** ((jnp.arange(n_embed, dtype=jnp.float32) // 2 * 2) / n_embed)
    w = pos[:, None] / denom[None, :]
    sin_part = jnp.sin(w[:, 0::2])
    cos_part = jnp.cos(w[:, 1::2])
    w = w.at[:, 0::2].set(sin_part).at[:, 1::2].set(cos_part)
    return w                                            # (max_len, n_embed)


def _full(shape):
    n = len(shape)
    return pl.BlockSpec(shape, lambda b, n=n: (0,) * n)


# ----------------------------------------------------------------------------
# Wrapper
# ----------------------------------------------------------------------------
def rel_pos_multi_head_attention(q, k, v, mask, params):
    """Forward pass of RelativePositionMultiHeadAttention (self-attention)."""
    if not (q is k and q is v):
        # TODO(synk): distinct key/value inputs would need separate projection
        # operands; the encoder layer only ever calls this as self-attention.
        raise NotImplementedError("kernel is specialised to q is k is v")
    x = q
    B, T, M = x.shape
    wq, wk, wv = params["wq"], params["wk"], params["wv"]      # (M, E, H)
    _, E, H = wq.shape
    HE = H * E
    inv_scale = 1.0 / (float(E) ** 0.5)
    tbl = params["pos_table"]                                  # (max_len, E)

    # fused Q/K/V weight (M, 3*H*E), head-major E-blocks, bf16; 1/sqrt(E)
    # folded into the query projection (and bu/bv) so no divide in-kernel.
    def head_major(w):                                         # (M,E,H)->(M,H*E)
        return jnp.transpose(w, (0, 2, 1)).reshape(M, HE)
    w_qkv = jnp.concatenate(
        [head_major(wq) * inv_scale, head_major(wk), head_major(wv)], axis=1)
    pad_lanes = (-w_qkv.shape[1]) % 128      # feed the MXU a full-lane output
    if pad_lanes:
        w_qkv = jnp.pad(w_qkv, ((0, 0), (0, pad_lanes)))
    w_qkv = w_qkv.astype(jnp.bfloat16)

    bu = (params["bu"].T * inv_scale).astype(jnp.float32)      # (H, E)
    bv = (params["bv"].T * inv_scale).astype(jnp.float32)      # (H, E)

    # fused, lane-dense output projection (H*E, Mpad), bf16
    m_pad = ((M + 127) // 128) * 128
    wo = jnp.transpose(params["wo"], (1, 0, 2)).reshape(HE, M)
    wo = jnp.pad(wo, ((0, 0), (0, m_pad - M))).astype(jnp.bfloat16)

    # relative-position table slice for the skew: row r = 0..2T-2 holds
    # embedding(rel = r-(T-1)); transposed to (E, W) and lane-padded to >=128.
    offset = tbl.shape[0] // 2 + tbl.shape[0] % 2
    rel = tbl[offset - (T - 1): offset + T]                    # (2T-1, E)
    w_lanes = max(128, ((2 * T - 1 + 127) // 128) * 128)
    rel_t = jnp.pad(rel.T, ((0, 0), (0, w_lanes - (2 * T - 1)))
                    ).astype(jnp.bfloat16)                     # (E, W)

    # additive key-mask bias (finite => NaN-free softmax for empty rows)
    bias = jnp.where(mask, 0.0, -1e30).astype(jnp.float32)[:, None, :]

    x_bf = x.astype(jnp.bfloat16)

    out = pl.pallas_call(
        _rel_mha_kernel,
        out_shape=jax.ShapeDtypeStruct((B, T, m_pad), jnp.float32),
        grid=(B,),
        in_specs=[
            pl.BlockSpec((1, T, M), lambda b: (b, 0, 0)),      # x
            pl.BlockSpec((1, 1, T), lambda b: (b, 0, 0)),      # mask bias
            _full(w_qkv.shape),
            _full(bu.shape),
            _full(bv.shape),
            _full(rel_t.shape),
            _full(wo.shape),
        ],
        out_specs=pl.BlockSpec((1, T, m_pad), lambda b: (b, 0, 0)),
        compiler_params=pltpu.CompilerParams(
            dimension_semantics=("parallel",),
            vmem_limit_bytes=32 * 1024 * 1024,
        ),
    )(x_bf, bias, w_qkv, bu, bv, rel_t, wo)

    # TODO(synk): for large T, tile the grid over (batch, query-tile) and stream
    # key tiles with an online-softmax (flash-style) accumulator.
    return out[:, :, :M]


# ----------------------------------------------------------------------------
# Pure-JAX f32 reference (mirrors the PyTorch einsums exactly)
# ----------------------------------------------------------------------------
def reference(q_in, k_in, v_in, mask, params):
    tbl = params["pos_table"]
    B, T, M = q_in.shape
    E = params["wq"].shape[1]
    scale = float(E) ** 0.5

    offset = tbl.shape[0] // 2 + tbl.shape[0] % 2
    pos_idx = jnp.arange(T)
    p = tbl[pos_idx[None, :] - pos_idx[:, None] + offset]      # (T, T, E)

    q = jnp.einsum('btm,meh->bteh', q_in, params["wq"])
    k = jnp.einsum('btm,meh->bteh', k_in, params["wk"])
    v = jnp.einsum('btm,meh->bteh', v_in, params["wv"])
    attn = (jnp.einsum('bqeh,bkeh->bqkh', q + params["bu"], k)
            + jnp.einsum('bqeh,qke->bqkh', q + params["bv"], p)) / scale
    attn = jnp.where(mask[:, None, :, None], attn, -jnp.inf)
    attn = jax.nn.softmax(attn, axis=-2)
    y = jnp.einsum('bqkh,bkeh->bqeh', attn, v)
    return jnp.einsum('bqeh,ehm->bqm', y, params["wo"])


# ----------------------------------------------------------------------------
if __name__ == "__main__":
    B, T = 2, 8
    n_heads, n_model, n_embed = 4, 64, 8
    max_len = 1024

    key = jax.random.PRNGKey(0)
    ks = jax.random.split(key, 8)
    w_scale = 0.15
    params = {
        "wq": w_scale * jax.random.normal(ks[0], (n_model, n_embed, n_heads), jnp.float32),
        "wk": w_scale * jax.random.normal(ks[1], (n_model, n_embed, n_heads), jnp.float32),
        "wv": w_scale * jax.random.normal(ks[2], (n_model, n_embed, n_heads), jnp.float32),
        "bu": w_scale * jax.random.normal(ks[3], (n_embed, n_heads), jnp.float32),
        "bv": w_scale * jax.random.normal(ks[4], (n_embed, n_heads), jnp.float32),
        "wo": w_scale * jax.random.normal(ks[5], (n_embed, n_heads, n_model), jnp.float32),
        "pos_table": make_rel_pos_table(max_len, n_embed),
    }

    x = jax.random.normal(ks[6], (B, T, n_model), jnp.float32)
    lengths = jnp.array([T, 5])
    mask = jnp.arange(T)[None, :] < lengths[:, None]           # (B, T) key mask

    out = rel_pos_multi_head_attention(x, x, x, mask, params)
    out = jax.block_until_ready(out)

    ref = reference(x, x, x, mask, params)
    max_err = float(jnp.max(jnp.abs(out - ref)))
    tol = 1e-2 + 5e-2 * float(jnp.max(jnp.abs(ref)))           # bf16-operand slack
    if not bool(jnp.all(jnp.isfinite(out))):
        raise AssertionError("non-finite values in kernel output")
    if max_err > tol:
        raise AssertionError(f"kernel mismatch: max abs err {max_err} (tol {tol})")

    print("KERNEL_OK")
</pallas_src>

<mosaic_0001>
module attributes {stable_mosaic.version = 11 : i64} {
  func.func @_rel_mha_kernel(%arg0: i32, %arg1: memref<1x8x64xbf16, #tpu.memory_space<vmem>>, %arg2: memref<1x1x8xf32, #tpu.memory_space<vmem>>, %arg3: memref<64x128xbf16, #tpu.memory_space<vmem>>, %arg4: memref<4x8xf32, #tpu.memory_space<vmem>>, %arg5: memref<4x8xf32, #tpu.memory_space<vmem>>, %arg6: memref<8x128xbf16, #tpu.memory_space<vmem>>, %arg7: memref<32x128xbf16, #tpu.memory_space<vmem>>, %arg8: memref<1x8x128xf32, #tpu.memory_space<vmem>>) attributes {dimension_semantics = [#tpu.dimension_semantics<parallel>], iteration_bounds = array<i64: 2>, scalar_prefetch = 0 : i64, scratch_operands = 0 : i64, tpu.core_type = #tpu.core_type<tc>, window_params = [{transform_indices = @transform_0, window_bounds = array<i64: 1, 8, 64>}, {transform_indices = @transform_1, window_bounds = array<i64: 1, 1, 8>}, {pipeline_mode = #tpu.pipeline_mode<synchronous>, transform_indices = @transform_2, window_bounds = array<i64: 64, 128>}, {pipeline_mode = #tpu.pipeline_mode<synchronous>, transform_indices = @transform_3, window_bounds = array<i64: 4, 8>}, {pipeline_mode = #tpu.pipeline_mode<synchronous>, transform_indices = @transform_4, window_bounds = array<i64: 4, 8>}, {pipeline_mode = #tpu.pipeline_mode<synchronous>, transform_indices = @transform_5, window_bounds = array<i64: 8, 128>}, {pipeline_mode = #tpu.pipeline_mode<synchronous>, transform_indices = @transform_6, window_bounds = array<i64: 32, 128>}, {transform_indices = @transform_7, window_bounds = array<i64: 1, 8, 128>}]} {
    %c0 = arith.constant 0 : index
    %c0_0 = arith.constant 0 : index
    %c0_1 = arith.constant 0 : index
    %0 = vector.load %arg1[%c0, %c0_0, %c0_1] : memref<1x8x64xbf16, #tpu.memory_space<vmem>>, vector<1x8x64xbf16>
    %1 = vector.shape_cast %0 : vector<1x8x64xbf16> to vector<8x64xbf16>
    %c0_2 = arith.constant 0 : index
    %c0_3 = arith.constant 0 : index
    %c0_4 = arith.constant 0 : index
    %2 = vector.load %arg2[%c0_2, %c0_3, %c0_4] : memref<1x1x8xf32, #tpu.memory_space<vmem>>, vector<1x1x8xf32>
    %3 = vector.shape_cast %2 : vector<1x1x8xf32> to vector<1x8xf32>
    %c0_5 = arith.constant 0 : index
    %c0_6 = arith.constant 0 : index
    %4 = vector.load %arg6[%c0_5, %c0_6] : memref<8x128xbf16, #tpu.memory_space<vmem>>, vector<8x128xbf16>
    %c0_7 = arith.constant 0 : index
    %c0_8 = arith.constant 0 : index
    %5 = vector.load %arg4[%c0_7, %c0_8] : memref<4x8xf32, #tpu.memory_space<vmem>>, vector<4x8xf32>
    %c0_9 = arith.constant 0 : index
    %c0_10 = arith.constant 0 : index
    %6 = vector.load %arg5[%c0_9, %c0_10] : memref<4x8xf32, #tpu.memory_space<vmem>>, vector<4x8xf32>
    %c0_11 = arith.constant 0 : index
    %c0_12 = arith.constant 0 : index
    %7 = vector.load %arg3[%c0_11, %c0_12] : memref<64x128xbf16, #tpu.memory_space<vmem>>, vector<64x128xbf16>
    %cst = arith.constant dense<0.000000e+00> : vector<8x128xf32>
    %8 = tpu.matmul %1, %7, %cst {dimension_numbers = #tpu.dot_dimension_numbers<[1], [0], [0], [1], [0, 0, 1, 1], [], []>} : vector<8x64xbf16>, vector<64x128xbf16>, vector<8x128xf32> -> vector<8x128xf32>
    %9 = tpu.iota {dimensions = array<i32: 0>} : vector<8x1xi32>
    %c7_i32 = arith.constant 7 : i32
    %10 = vector.broadcast %c7_i32 : i32 to vector<8x1xi32>
    %11 = arith.subi %10, %9 : vector<8x1xi32>
    %c0_i32 = arith.constant 0 : i32
    %12 = vector.broadcast %c0_i32 : i32 to vector<8x1xi32>
    %13 = arith.shrsi %11, %12 : vector<8x1xi32>
    %c1_i32 = arith.constant 1 : i32
    %14 = vector.broadcast %c1_i32 : i32 to vector<8x1xi32>
    %15 = arith.andi %13, %14 : vector<8x1xi32>
    %c0_i32_13 = arith.constant 0 : i32
    %16 = vector.broadcast %c0_i32_13 : i32 to vector<8x1xi32>
    %17 = arith.cmpi ne, %15, %16 : vector<8x1xi32>
    %c1_i32_14 = arith.constant 1 : i32
    %18 = vector.broadcast %c1_i32_14 : i32 to vector<8x1xi32>
    %19 = arith.shrsi %11, %18 : vector<8x1xi32>
    %c1_i32_15 = arith.constant 1 : i32
    %20 = vector.broadcast %c1_i32_15 : i32 to vector<8x1xi32>
    %21 = arith.andi %19, %20 : vector<8x1xi32>
    %c0_i32_16 = arith.constant 0 : i32
    %22 = vector.broadcast %c0_i32_16 : i32 to vector<8x1xi32>
    %23 = arith.cmpi ne, %21, %22 : vector<8x1xi32>
    %c2_i32 = arith.constant 2 : i32
    %24 = vector.broadcast %c2_i32 : i32 to vector<8x1xi32>
    %25 = arith.shrsi %11, %24 : vector<8x1xi32>
    %c1_i32_17 = arith.constant 1 : i32
    %26 = vector.broadcast %c1_i32_17 : i32 to vector<8x1xi32>
    %27 = arith.andi %25, %26 : vector<8x1xi32>
    %c0_i32_18 = arith.constant 0 : i32
    %28 = vector.broadcast %c0_i32_18 : i32 to vector<8x1xi32>
    %29 = arith.cmpi ne, %27, %28 : vector<8x1xi32>
    %cst_19 = arith.constant 0.000000e+00 : f32
    %30 = vector.broadcast %cst_19 : f32 to vector<8x1xf32>
    %cst_20 = arith.constant 0.000000e+00 : f32
    %31 = vector.broadcast %cst_20 : f32 to vector<8x2xf32>
    %cst_21 = arith.constant 0.000000e+00 : f32
    %32 = vector.broadcast %cst_21 : f32 to vector<8x4xf32>
    %33 = vector.extract_strided_slice %8 {offsets = [0, 0], sizes = [8, 8], strides = [1, 1]} : vector<8x128xf32> to vector<8x8xf32>
    %34 = vector.extract_strided_slice %8 {offsets = [0, 32], sizes = [8, 8], strides = [1, 1]} : vector<8x128xf32> to vector<8x8xf32>
    %35 = vector.extract_strided_slice %8 {offsets = [0, 64], sizes = [8, 8], strides = [1, 1]} : vector<8x128xf32> to vector<8x8xf32>
    %36 = vector.extract_strided_slice %5 {offsets = [0, 0], sizes = [1, 8], strides = [1, 1]} : vector<4x8xf32> to vector<1x8xf32>
    %37 = vector.broadcast %36 : vector<1x8xf32> to vector<8x8xf32>
    %38 = arith.addf %33, %37 : vector<8x8xf32>
    %39 = arith.truncf %38 : vector<8x8xf32> to vector<8x8xbf16>
    %40 = arith.truncf %34 : vector<8x8xf32> to vector<8x8xbf16>
    %cst_22 = arith.constant dense<0.000000e+00> : vector<8x8xf32>
    %41 = tpu.matmul %39, %40, %cst_22 {dimension_numbers = #tpu.dot_dimension_numbers<[1], [1], [0], [0], [0, 0, 1, 0], [], []>} : vector<8x8xbf16>, vector<8x8xbf16>, vector<8x8xf32> -> vector<8x8xf32>
    %42 = vector.extract_strided_slice %6 {offsets = [0, 0], sizes = [1, 8], strides = [1, 1]} : vector<4x8xf32> to vector<1x8xf32>
    %43 = vector.broadcast %42 : vector<1x8xf32> to vector<8x8xf32>
    %44 = arith.addf %33, %43 : vector<8x8xf32>
    %45 = arith.truncf %44 : vector<8x8xf32> to vector<8x8xbf16>
    %cst_23 = arith.constant dense<0.000000e+00> : vector<8x128xf32>
    %46 = tpu.matmul %45, %4, %cst_23 {dimension_numbers = #tpu.dot_dimension_numbers<[1], [0], [0], [1], [0, 0, 1, 1], [], []>} : vector<8x8xbf16>, vector<8x128xbf16>, vector<8x128xf32> -> vector<8x128xf32>
    %47 = vector.extract_strided_slice %46 {offsets = [0, 1], sizes = [8, 127], strides = [1, 1]} : vector<8x128xf32> to vector<8x127xf32>
    %48 = tpu.concatenate %47, %30 in 1 : vector<8x127xf32>, vector<8x1xf32> -> vector<8x128xf32>
    %49 = vector.shape_cast %17 : vector<8x1xi1> to vector<8x1xi1>
    %50 = vector.broadcast %49 : vector<8x1xi1> to vector<8x128xi1>
    %51 = arith.select %50, %48, %46 : vector<8x128xi1>, vector<8x128xf32>
    %52 = vector.extract_strided_slice %51 {offsets = [0, 2], sizes = [8, 126], strides = [1, 1]} : vector<8x128xf32> to vector<8x126xf32>
    %53 = tpu.concatenate %52, %31 in 1 : vector<8x126xf32>, vector<8x2xf32> -> vector<8x128xf32>
    %54 = vector.shape_cast %23 : vector<8x1xi1> to vector<8x1xi1>
    %55 = vector.broadcast %54 : vector<8x1xi1> to vector<8x128xi1>
    %56 = arith.select %55, %53, %51 : vector<8x128xi1>, vector<8x128xf32>
    %57 = vector.extract_strided_slice %56 {offsets = [0, 4], sizes = [8, 124], strides = [1, 1]} : vector<8x128xf32> to vector<8x124xf32>
    %58 = tpu.concatenate %57, %32 in 1 : vector<8x124xf32>, vector<8x4xf32> -> vector<8x128xf32>
    %59 = vector.shape_cast %29 : vector<8x1xi1> to vector<8x1xi1>
    %60 = vector.broadcast %59 : vector<8x1xi1> to vector<8x128xi1>
    %61 = arith.select %60, %58, %56 : vector<8x128xi1>, vector<8x128xf32>
    %62 = vector.extract_strided_slice %61 {offsets = [0, 0], sizes = [8, 8], strides = [1, 1]} : vector<8x128xf32> to vector<8x8xf32>
    %63 = arith.addf %41, %62 : vector<8x8xf32>
    %64 = vector.broadcast %3 : vector<1x8xf32> to vector<8x8xf32>
    %65 = arith.addf %63, %64 : vector<8x8xf32>
    %cst_24 = arith.constant dense<0xFF800000> : vector<8xf32>
    %66 = vector.multi_reduction <maximumf>, %65, %cst_24 [1] : vector<8x8xf32> to vector<8xf32>
    %67 = vector.shape_cast %66 : vector<8xf32> to vector<8x1xf32>
    %68 = vector.broadcast %67 : vector<8x1xf32> to vector<8x8xf32>
    %69 = arith.subf %65, %68 : vector<8x8xf32>
    %70 = math.exp %69 : vector<8x8xf32>
    %cst_25 = arith.constant dense<0.000000e+00> : vector<8xf32>
    %71 = vector.multi_reduction <add>, %70, %cst_25 [1] : vector<8x8xf32> to vector<8xf32>
    %72 = vector.shape_cast %71 : vector<8xf32> to vector<8x1xf32>
    %73 = tpu.reciprocal %72 {approx = true} : vector<8x1xf32> -> vector<8x1xf32>
    %74 = vector.broadcast %73 : vector<8x1xf32> to vector<8x8xf32>
    %75 = arith.mulf %70, %74 : vector<8x8xf32>
    %76 = arith.truncf %75 : vector<8x8xf32> to vector<8x8xbf16>
    %77 = arith.truncf %35 : vector<8x8xf32> to vector<8x8xbf16>
    %cst_26 = arith.constant dense<0.000000e+00> : vector<8x8xf32>
    %78 = tpu.matmul %76, %77, %cst_26 {dimension_numbers = #tpu.dot_dimension_numbers<[1], [0], [0], [1], [0, 0, 1, 1], [], []>} : vector<8x8xbf16>, vector<8x8xbf16>, vector<8x8xf32> -> vector<8x8xf32>
    %79 = vector.extract_strided_slice %8 {offsets = [0, 8], sizes = [8, 8], strides = [1, 1]} : vector<8x128xf32> to vector<8x8xf32>
    %80 = vector.extract_strided_slice %8 {offsets = [0, 40], sizes = [8, 8], strides = [1, 1]} : vector<8x128xf32> to vector<8x8xf32>
    %81 = vector.extract_strided_slice %8 {offsets = [0, 72], sizes = [8, 8], strides = [1, 1]} : vector<8x128xf32> to vector<8x8xf32>
    %82 = vector.extract_strided_slice %5 {offsets = [1, 0], sizes = [1, 8], strides = [1, 1]} : vector<4x8xf32> to vector<1x8xf32>
    %83 = vector.broadcast %82 : vector<1x8xf32> to vector<8x8xf32>
    %84 = arith.addf %79, %83 : vector<8x8xf32>
    %85 = arith.truncf %84 : vector<8x8xf32> to vector<8x8xbf16>
    %86 = arith.truncf %80 : vector<8x8xf32> to vector<8x8xbf16>
    %cst_27 = arith.constant dense<0.000000e+00> : vector<8x8xf32>
    %87 = tpu.matmul %85, %86, %cst_27 {dimension_numbers = #tpu.dot_dimension_numbers<[1], [1], [0], [0], [0, 0, 1, 0], [], []>} : vector<8x8xbf16>, vector<8x8xbf16>, vector<8x8xf32> -> vector<8x8xf32>
    %88 = vector.extract_strided_slice %6 {offsets = [1, 0], sizes = [1, 8], strides = [1, 1]} : vector<4x8xf32> to vector<1x8xf32>
    %89 = vector.broadcast %88 : vector<1x8xf32> to vector<8x8xf32>
    %90 = arith.addf %79, %89 : vector<8x8xf32>
    %91 = arith.truncf %90 : vector<8x8xf32> to vector<8x8xbf16>
    %cst_28 = arith.constant dense<0.000000e+00> : vector<8x128xf32>
    %92 = tpu.matmul %91, %4, %cst_28 {dimension_numbers = #tpu.dot_dimension_numbers<[1], [0], [0], [1], [0, 0, 1, 1], [], []>} : vector<8x8xbf16>, vector<8x128xbf16>, vector<8x128xf32> -> vector<8x128xf32>
    %93 = vector.extract_strided_slice %92 {offsets = [0, 1], sizes = [8, 127], strides = [1, 1]} : vector<8x128xf32> to vector<8x127xf32>
    %94 = tpu.concatenate %93, %30 in 1 : vector<8x127xf32>, vector<8x1xf32> -> vector<8x128xf32>
    %95 = vector.shape_cast %17 : vector<8x1xi1> to vector<8x1xi1>
    %96 = vector.broadcast %95 : vector<8x1xi1> to vector<8x128xi1>
    %97 = arith.select %96, %94, %92 : vector<8x128xi1>, vector<8x128xf32>
    %98 = vector.extract_strided_slice %97 {offsets = [0, 2], sizes = [8, 126], strides = [1, 1]} : vector<8x128xf32> to vector<8x126xf32>
    %99 = tpu.concatenate %98, %31 in 1 : vector<8x126xf32>, vector<8x2xf32> -> vector<8x128xf32>
    %100 = vector.shape_cast %23 : vector<8x1xi1> to vector<8x1xi1>
    %101 = vector.broadcast %100 : vector<8x1xi1> to vector<8x128xi1>
    %102 = arith.select %101, %99, %97 : vector<8x128xi1>, vector<8x128xf32>
    %103 = vector.extract_strided_slice %102 {offsets = [0, 4], sizes = [8, 124], strides = [1, 1]} : vector<8x128xf32> to vector<8x124xf32>
    %104 = tpu.concatenate %103, %32 in 1 : vector<8x124xf32>, vector<8x4xf32> -> vector<8x128xf32>
    %105 = vector.shape_cast %29 : vector<8x1xi1> to vector<8x1xi1>
    %106 = vector.broadcast %105 : vector<8x1xi1> to vector<8x128xi1>
    %107 = arith.select %106, %104, %102 : vector<8x128xi1>, vector<8x128xf32>
    %108 = vector.extract_strided_slice %107 {offsets = [0, 0], sizes = [8, 8], strides = [1, 1]} : vector<8x128xf32> to vector<8x8xf32>
    %109 = arith.addf %87, %108 : vector<8x8xf32>
    %110 = vector.broadcast %3 : vector<1x8xf32> to vector<8x8xf32>
    %111 = arith.addf %109, %110 : vector<8x8xf32>
    %cst_29 = arith.constant dense<0xFF800000> : vector<8xf32>
    %112 = vector.multi_reduction <maximumf>, %111, %cst_29 [1] : vector<8x8xf32> to vector<8xf32>
    %113 = vector.shape_cast %112 : vector<8xf32> to vector<8x1xf32>
    %114 = vector.broadcast %113 : vector<8x1xf32> to vector<8x8xf32>
    %115 = arith.subf %111, %114 : vector<8x8xf32>
    %116 = math.exp %115 : vector<8x8xf32>
    %cst_30 = arith.constant dense<0.000000e+00> : vector<8xf32>
    %117 = vector.multi_reduction <add>, %116, %cst_30 [1] : vector<8x8xf32> to vector<8xf32>
    %118 = vector.shape_cast %117 : vector<8xf32> to vector<8x1xf32>
    %119 = tpu.reciprocal %118 {approx = true} : vector<8x1xf32> -> vector<8x1xf32>
    %120 = vector.broadcast %119 : vector<8x1xf32> to vector<8x8xf32>
    %121 = arith.mulf %116, %120 : vector<8x8xf32>
    %122 = arith.truncf %121 : vector<8x8xf32> to vector<8x8xbf16>
    %123 = arith.truncf %81 : vector<8x8xf32> to vector<8x8xbf16>
    %cst_31 = arith.constant dense<0.000000e+00> : vector<8x8xf32>
    %124 = tpu.matmul %122, %123, %cst_31 {dimension_numbers = #tpu.dot_dimension_numbers<[1], [0], [0], [1], [0, 0, 1, 1], [], []>} : vector<8x8xbf16>, vector<8x8xbf16>, vector<8x8xf32> -> vector<8x8xf32>
    %125 = vector.extract_strided_slice %8 {offsets = [0, 16], sizes = [8, 8], strides = [1, 1]} : vector<8x128xf32> to vector<8x8xf32>
    %126 = vector.extract_strided_slice %8 {offsets = [0, 48], sizes = [8, 8], strides = [1, 1]} : vector<8x128xf32> to vector<8x8xf32>
    %127 = vector.extract_strided_slice %8 {offsets = [0, 80], sizes = [8, 8], strides = [1, 1]} : vector<8x128xf32> to vector<8x8xf32>
    %128 = vector.extract_strided_slice %5 {offsets = [2, 0], sizes = [1, 8], strides = [1, 1]} : vector<4x8xf32> to vector<1x8xf32>
    %129 = vector.broadcast %128 : vector<1x8xf32> to vector<8x8xf32>
    %130 = arith.addf %125, %129 : vector<8x8xf32>
    %131 = arith.truncf %130 : vector<8x8xf32> to vector<8x8xbf16>
    %132 = arith.truncf %126 : vector<8x8xf32> to vector<8x8xbf16>
    %cst_32 = arith.constant dense<0.000000e+00> : vector<8x8xf32>
    %133 = tpu.matmul %131, %132, %cst_32 {dimension_numbers = #tpu.dot_dimension_numbers<[1], [1], [0], [0], [0, 0, 1, 0], [], []>} : vector<8x8xbf16>, vector<8x8xbf16>, vector<8x8xf32> -> vector<8x8xf32>
    %134 = vector.extract_strided_slice %6 {offsets = [2, 0], sizes = [1, 8], strides = [1, 1]} : vector<4x8xf32> to vector<1x8xf32>
    %135 = vector.broadcast %134 : vector<1x8xf32> to vector<8x8xf32>
    %136 = arith.addf %125, %135 : vector<8x8xf32>
    %137 = arith.truncf %136 : vector<8x8xf32> to vector<8x8xbf16>
    %cst_33 = arith.constant dense<0.000000e+00> : vector<8x128xf32>
    %138 = tpu.matmul %137, %4, %cst_33 {dimension_numbers = #tpu.dot_dimension_numbers<[1], [0], [0], [1], [0, 0, 1, 1], [], []>} : vector<8x8xbf16>, vector<8x128xbf16>, vector<8x128xf32> -> vector<8x128xf32>
    %139 = vector.extract_strided_slice %138 {offsets = [0, 1], sizes = [8, 127], strides = [1, 1]} : vector<8x128xf32> to vector<8x127xf32>
    %140 = tpu.concatenate %139, %30 in 1 : vector<8x127xf32>, vector<8x1xf32> -> vector<8x128xf32>
    %141 = vector.shape_cast %17 : vector<8x1xi1> to vector<8x1xi1>
    %142 = vector.broadcast %141 : vector<8x1xi1> to vector<8x128xi1>
    %143 = arith.select %142, %140, %138 : vector<8x128xi1>, vector<8x128xf32>
    %144 = vector.extract_strided_slice %143 {offsets = [0, 2], sizes = [8, 126], strides = [1, 1]} : vector<8x128xf32> to vector<8x126xf32>
    %145 = tpu.concatenate %144, %31 in 1 : vector<8x126xf32>, vector<8x2xf32> -> vector<8x128xf32>
    %146 = vector.shape_cast %23 : vector<8x1xi1> to vector<8x1xi1>
    %147 = vector.broadcast %146 : vector<8x1xi1> to vector<8x128xi1>
    %148 = arith.select %147, %145, %143 : vector<8x128xi1>, vector<8x128xf32>
    %149 = vector.extract_strided_slice %148 {offsets = [0, 4], sizes = [8, 124], strides = [1, 1]} : vector<8x128xf32> to vector<8x124xf32>
    %150 = tpu.concatenate %149, %32 in 1 : vector<8x124xf32>, vector<8x4xf32> -> vector<8x128xf32>
    %151 = vector.shape_cast %29 : vector<8x1xi1> to vector<8x1xi1>
    %152 = vector.broadcast %151 : vector<8x1xi1> to vector<8x128xi1>
    %153 = arith.select %152, %150, %148 : vector<8x128xi1>, vector<8x128xf32>
    %154 = vector.extract_strided_slice %153 {offsets = [0, 0], sizes = [8, 8], strides = [1, 1]} : vector<8x128xf32> to vector<8x8xf32>
    %155 = arith.addf %133, %154 : vector<8x8xf32>
    %156 = vector.broadcast %3 : vector<1x8xf32> to vector<8x8xf32>
    %157 = arith.addf %155, %156 : vector<8x8xf32>
    %cst_34 = arith.constant dense<0xFF800000> : vector<8xf32>
    %158 = vector.multi_reduction <maximumf>, %157, %cst_34 [1] : vector<8x8xf32> to vector<8xf32>
    %159 = vector.shape_cast %158 : vector<8xf32> to vector<8x1xf32>
    %160 = vector.broadcast %159 : vector<8x1xf32> to vector<8x8xf32>
    %161 = arith.subf %157, %160 : vector<8x8xf32>
    %162 = math.exp %161 : vector<8x8xf32>
    %cst_35 = arith.constant dense<0.000000e+00> : vector<8xf32>
    %163 = vector.multi_reduction <add>, %162, %cst_35 [1] : vector<8x8xf32> to vector<8xf32>
    %164 = vector.shape_cast %163 : vector<8xf32> to vector<8x1xf32>
    %165 = tpu.reciprocal %164 {approx = true} : vector<8x1xf32> -> vector<8x1xf32>
    %166 = vector.broadcast %165 : vector<8x1xf32> to vector<8x8xf32>
    %167 = arith.mulf %162, %166 : vector<8x8xf32>
    %168 = arith.truncf %167 : vector<8x8xf32> to vector<8x8xbf16>
    %169 = arith.truncf %127 : vector<8x8xf32> to vector<8x8xbf16>
    %cst_36 = arith.constant dense<0.000000e+00> : vector<8x8xf32>
    %170 = tpu.matmul %168, %169, %cst_36 {dimension_numbers = #tpu.dot_dimension_numbers<[1], [0], [0], [1], [0, 0, 1, 1], [], []>} : vector<8x8xbf16>, vector<8x8xbf16>, vector<8x8xf32> -> vector<8x8xf32>
    %171 = vector.extract_strided_slice %8 {offsets = [0, 24], sizes = [8, 8], strides = [1, 1]} : vector<8x128xf32> to vector<8x8xf32>
    %172 = vector.extract_strided_slice %8 {offsets = [0, 56], sizes = [8, 8], strides = [1, 1]} : vector<8x128xf32> to vector<8x8xf32>
    %173 = vector.extract_strided_slice %8 {offsets = [0, 88], sizes = [8, 8], strides = [1, 1]} : vector<8x128xf32> to vector<8x8xf32>
    %174 = vector.extract_strided_slice %5 {offsets = [3, 0], sizes = [1, 8], strides = [1, 1]} : vector<4x8xf32> to vector<1x8xf32>
    %175 = vector.broadcast %174 : vector<1x8xf32> to vector<8x8xf32>
    %176 = arith.addf %171, %175 : vector<8x8xf32>
    %177 = arith.truncf %176 : vector<8x8xf32> to vector<8x8xbf16>
    %178 = arith.truncf %172 : vector<8x8xf32> to vector<8x8xbf16>
    %cst_37 = arith.constant dense<0.000000e+00> : vector<8x8xf32>
    %179 = tpu.matmul %177, %178, %cst_37 {dimension_numbers = #tpu.dot_dimension_numbers<[1], [1], [0], [0], [0, 0, 1, 0], [], []>} : vector<8x8xbf16>, vector<8x8xbf16>, vector<8x8xf32> -> vector<8x8xf32>
    %180 = vector.extract_strided_slice %6 {offsets = [3, 0], sizes = [1, 8], strides = [1, 1]} : vector<4x8xf32> to vector<1x8xf32>
    %181 = vector.broadcast %180 : vector<1x8xf32> to vector<8x8xf32>
    %182 = arith.addf %171, %181 : vector<8x8xf32>
    %183 = arith.truncf %182 : vector<8x8xf32> to vector<8x8xbf16>
    %cst_38 = arith.constant dense<0.000000e+00> : vector<8x128xf32>
    %184 = tpu.matmul %183, %4, %cst_38 {dimension_numbers = #tpu.dot_dimension_numbers<[1], [0], [0], [1], [0, 0, 1, 1], [], []>} : vector<8x8xbf16>, vector<8x128xbf16>, vector<8x128xf32> -> vector<8x128xf32>
    %185 = vector.extract_strided_slice %184 {offsets = [0, 1], sizes = [8, 127], strides = [1, 1]} : vector<8x128xf32> to vector<8x127xf32>
    %186 = tpu.concatenate %185, %30 in 1 : vector<8x127xf32>, vector<8x1xf32> -> vector<8x128xf32>
    %187 = vector.shape_cast %17 : vector<8x1xi1> to vector<8x1xi1>
    %188 = vector.broadcast %187 : vector<8x1xi1> to vector<8x128xi1>
    %189 = arith.select %188, %186, %184 : vector<8x128xi1>, vector<8x128xf32>
    %190 = vector.extract_strided_slice %189 {offsets = [0, 2], sizes = [8, 126], strides = [1, 1]} : vector<8x128xf32> to vector<8x126xf32>
    %191 = tpu.concatenate %190, %31 in 1 : vector<8x126xf32>, vector<8x2xf32> -> vector<8x128xf32>
    %192 = vector.shape_cast %23 : vector<8x1xi1> to vector<8x1xi1>
    %193 = vector.broadcast %192 : vector<8x1xi1> to vector<8x128xi1>
    %194 = arith.select %193, %191, %189 : vector<8x128xi1>, vector<8x128xf32>
    %195 = vector.extract_strided_slice %194 {offsets = [0, 4], sizes = [8, 124], strides = [1, 1]} : vector<8x128xf32> to vector<8x124xf32>
    %196 = tpu.concatenate %195, %32 in 1 : vector<8x124xf32>, vector<8x4xf32> -> vector<8x128xf32>
    %197 = vector.shape_cast %29 : vector<8x1xi1> to vector<8x1xi1>
    %198 = vector.broadcast %197 : vector<8x1xi1> to vector<8x128xi1>
    %199 = arith.select %198, %196, %194 : vector<8x128xi1>, vector<8x128xf32>
    %200 = vector.extract_strided_slice %199 {offsets = [0, 0], sizes = [8, 8], strides = [1, 1]} : vector<8x128xf32> to vector<8x8xf32>
    %201 = arith.addf %179, %200 : vector<8x8xf32>
    %202 = vector.broadcast %3 : vector<1x8xf32> to vector<8x8xf32>
    %203 = arith.addf %201, %202 : vector<8x8xf32>
    %cst_39 = arith.constant dense<0xFF800000> : vector<8xf32>
    %204 = vector.multi_reduction <maximumf>, %203, %cst_39 [1] : vector<8x8xf32> to vector<8xf32>
    %205 = vector.shape_cast %204 : vector<8xf32> to vector<8x1xf32>
    %206 = vector.broadcast %205 : vector<8x1xf32> to vector<8x8xf32>
    %207 = arith.subf %203, %206 : vector<8x8xf32>
    %208 = math.exp %207 : vector<8x8xf32>
    %cst_40 = arith.constant dense<0.000000e+00> : vector<8xf32>
    %209 = vector.multi_reduction <add>, %208, %cst_40 [1] : vector<8x8xf32> to vector<8xf32>
    %210 = vector.shape_cast %209 : vector<8xf32> to vector<8x1xf32>
    %211 = tpu.reciprocal %210 {approx = true} : vector<8x1xf32> -> vector<8x1xf32>
    %212 = vector.broadcast %211 : vector<8x1xf32> to vector<8x8xf32>
    %213 = arith.mulf %208, %212 : vector<8x8xf32>
    %214 = arith.truncf %213 : vector<8x8xf32> to vector<8x8xbf16>
    %215 = arith.truncf %173 : vector<8x8xf32> to vector<8x8xbf16>
    %cst_41 = arith.constant dense<0.000000e+00> : vector<8x8xf32>
    %216 = tpu.matmul %214, %215, %cst_41 {dimension_numbers = #tpu.dot_dimension_numbers<[1], [0], [0], [1], [0, 0, 1, 1], [], []>} : vector<8x8xbf16>, vector<8x8xbf16>, vector<8x8xf32> -> vector<8x8xf32>
    %217 = tpu.concatenate %78, %124, %170, %216 in 1 : vector<8x8xf32>, vector<8x8xf32>, vector<8x8xf32>, vector<8x8xf32> -> vector<8x32xf32>
    %218 = arith.truncf %217 : vector<8x32xf32> to vector<8x32xbf16>
    %c0_42 = arith.constant 0 : index
    %c0_43 = arith.constant 0 : index
    %219 = vector.load %arg7[%c0_42, %c0_43] : memref<32x128xbf16, #tpu.memory_space<vmem>>, vector<32x128xbf16>
    %cst_44 = arith.constant dense<0.000000e+00> : vector<8x128xf32>
    %220 = tpu.matmul %218, %219, %cst_44 {dimension_numbers = #tpu.dot_dimension_numbers<[1], [0], [0], [1], [0, 0, 1, 1], [], []>} : vector<8x32xbf16>, vector<32x128xbf16>, vector<8x128xf32> -> vector<8x128xf32>
    %c0_45 = arith.constant 0 : index
    %c0_46 = arith.constant 0 : index
    %c0_47 = arith.constant 0 : index
    %221 = vector.load %arg8[%c0_45, %c0_46, %c0_47] : memref<1x8x128xf32, #tpu.memory_space<vmem>>, vector<1x8x128xf32>
    %222 = vector.shape_cast %221 : vector<1x8x128xf32> to vector<8x128xf32>
    %223 = vector.shape_cast %220 : vector<8x128xf32> to vector<1x8x128xf32>
    tpu.vector_store %arg8[%c0_45, %c0_46, %c0_47], %223 {strides = array<i32>} : memref<1x8x128xf32, #tpu.memory_space<vmem>>, vector<1x8x128xf32>,
    return
  }
  func.func @transform_0(%arg0: i32) -> (i32, i32, i32) {
    %c0_i32 = arith.constant 0 : i32
    %c0_i32_0 = arith.constant 0 : i32
    %c0_i32_1 = arith.constant 0 : i32
    return %arg0, %c0_i32, %c0_i32_0 : i32, i32, i32
  }
  func.func @transform_1(%arg0: i32) -> (i32, i32, i32) {
    %c0_i32 = arith.constant 0 : i32
    %c0_i32_0 = arith.constant 0 : i32
    %c0_i32_1 = arith.constant 0 : i32
    return %arg0, %c0_i32, %c0_i32_0 : i32, i32, i32
  }
  func.func @transform_2(%arg0: i32) -> (i32, i32) {
    %c0_i32 = arith.constant 0 : i32
    %c0_i32_0 = arith.constant 0 : i32
    %c0_i32_1 = arith.constant 0 : i32
    return %c0_i32, %c0_i32_0 : i32, i32
  }
  func.func @transform_3(%arg0: i32) -> (i32, i32) {
    %c0_i32 = arith.constant 0 : i32
    %c0_i32_0 = arith.constant 0 : i32
    %c0_i32_1 = arith.constant 0 : i32
    return %c0_i32, %c0_i32_0 : i32, i32
  }
  func.func @transform_4(%arg0: i32) -> (i32, i32) {
    %c0_i32 = arith.constant 0 : i32
    %c0_i32_0 = arith.constant 0 : i32
    %c0_i32_1 = arith.constant 0 : i32
    return %c0_i32, %c0_i32_0 : i32, i32
  }
  func.func @transform_5(%arg0: i32) -> (i32, i32) {
    %c0_i32 = arith.constant 0 : i32
    %c0_i32_0 = arith.constant 0 : i32
    %c0_i32_1 = arith.constant 0 : i32
    return %c0_i32, %c0_i32_0 : i32, i32
  }
  func.func @transform_6(%arg0: i32) -> (i32, i32) {
    %c0_i32 = arith.constant 0 : i32
    %c0_i32_0 = arith.constant 0 : i32
    %c0_i32_1 = arith.constant 0 : i32
    return %c0_i32, %c0_i32_0 : i32, i32
  }
  func.func @transform_7(%arg0: i32) -> (i32, i32, i32) {
    %c0_i32 = arith.constant 0 : i32
    %c0_i32_0 = arith.constant 0 : i32
    %c0_i32_1 = arith.constant 0 : i32
    return %arg0, %c0_i32, %c0_i32_0 : i32, i32, i32
  }
}

</mosaic_0001>

<llo_original>
// kernel: tpu_custom_call.1
$region0: #{tpu_custom_call.1}
  #allocation0 [shape = 'u32[]', space=smem, size = 0x4, offset = 0x4, fixed_abs, tag = 'smem constant byte address 0x4 - core index']
  #allocation1 [shape = 'u32[72,128]{1,0:T(1,128)}', space=vmem, size = 0x9000, scoped, tag = 'internal scratch']
  %s0 = inlined_call_operand.hbm [shape: bf16[2,8,64], index: 0, kind: input, shape index: {}]
  %s1 = inlined_call_operand.hbm [shape: f32[2,1,8], index: 1, kind: input, shape index: {}]
  %s2 = inlined_call_operand.hbm [shape: bf16[64,128], index: 2, kind: input, shape index: {}]
  %s3 = inlined_call_operand.hbm [shape: f32[4,8], index: 3, kind: input, shape index: {}]
  %s4 = inlined_call_operand.hbm [shape: f32[4,8], index: 4, kind: input, shape index: {}]
  %s5 = inlined_call_operand.vmem [shape: bf16[8,128], index: 5, kind: input, shape index: {}]
  %s6 = inlined_call_operand.hbm [shape: bf16[32,128], index: 6, kind: input, shape index: {}]
  %s7 = inlined_call_operand.hbm [shape: f32[2,8,128], index: 7, kind: output, shape index: {}]
  %s8 = sld [smem:[#allocation0]]
  $region85: #{tpu_custom_call.1} parent=0
    _
  %s10 = ssub.s32 1, %s8
  %s11 = scalar_select 0, %s10, %s8
  $region1: #{tpu_custom_call.1} parent=0
    #allocation2 [shape = 'u8[4096]{0}', space=vmem, size = 0x1000, scoped, tag = 'input window, operand 0']
    #allocation3 [shape = 's32[2]{0}', space=sflag, size = 0x8, scoped, tag = 'scoped memory for tpu_custom_call.1']
    #allocation4 [shape = 's32[2]{0}', space=sflag, size = 0x8, scoped, tag = 'scoped memory for tpu_custom_call.1']
    #allocation5 [shape = 'u8[1024]{0}', space=vmem, size = 0x400, scoped, tag = 'input window, operand 1']
    #allocation6 [shape = 's32[2]{0}', space=sflag, size = 0x8, scoped, tag = 'scoped memory for tpu_custom_call.1']
    #allocation7 [shape = 'u8[16384]{0}', space=vmem, size = 0x4000, scoped, tag = 'input window, operand 2, single buffered']
    #allocation8 [shape = 'u8[2048]{0}', space=vmem, size = 0x800, scoped, tag = 'input window, operand 3, single buffered']
    #allocation9 [shape = 's32[1]{0}', space=sflag, size = 0x4, scoped, tag = 'scoped memory for tpu_custom_call.1']
    #allocation10 [shape = 'u8[2048]{0}', space=vmem, size = 0x800, scoped, tag = 'input window, operand 4, single buffered']
    #allocation11 [shape = 'u8[8192]{0}', space=vmem, size = 0x2000, scoped, tag = 'input window, operand 6, single buffered']
    #allocation12 [shape = 's32[1]{0}', space=sflag, size = 0x4, scoped, tag = 'scoped memory for tpu_custom_call.1']
    #allocation13 [shape = 'u8[8192]{0}', space=vmem, size = 0x2000, scoped, tag = 'output window, operand 0']
    %12 = vsyncpa [#allocation3], 0
    %s13 = scalar_lea.sflag [#allocation3], 1
    %14 = vsyncpa %s13, 0
    %15 = vsyncpa [#allocation6], 0
    %s16 = scalar_lea.sflag [#allocation6], 1
    %17 = vsyncpa %s16, 0
    %18 = vsyncpa [#allocation9], 0
    %19 = vsyncpa [#allocation12], 0
    %20 = vsyncpa [#allocation4], 0
    %s21 = scalar_lea.sflag [#allocation4], 1
    %22 = vsyncpa %s21, 0
    loop: start=0, step=1, limit=4
    $region2: #{tpu_custom_call.1} parent=1 // loop_pre_header
      _
    $region3: #{tpu_custom_call.1} parent=1 // loop_header
      %s24 = sphi 0, %s28
      %p25 = scmp.ge.s32.totalorder %s24, 4
      %s34 = sphi 0, %s36
      %s37 = sphi 0, %s34
      %s38 = sphi 0, %s37
      %s54 = sphi 0, %s38
      %s60 = sphi 0, %s62
      %s63 = sphi 0, %s60
      %s64 = sphi 0, %s63
      %s80 = sphi 0, %s64
      %s84 = sphi 0, %s84
      %s86 = sphi 0, %s84
      %s87 = sphi 0, %s86
      %s101 = sphi 0, %s87
      %s105 = sphi 0, %s105
      %s107 = sphi 0, %s105
      %s108 = sphi 0, %s107
      %s122 = sphi 0, %s108
      %s126 = sphi 0, %s126
      %s128 = sphi 0, %s126
      %s129 = sphi 0, %s128
      %s143 = sphi 0, %s129
      %s147 = sphi 0, %s147
      %s149 = sphi 0, %s147
      %s150 = sphi 0, %s149
      %s164 = sphi 0, %s150
      %s168 = sphi 0, %s168
      %s170 = sphi 0, %s168
      %s171 = sphi 0, %s170
      %s185 = sphi 0, %s171
      %s191 = sphi 0, %s193
      %s194 = sphi 0, %s191
      %s195 = sphi 0, %s194
      %s211 = sphi 0, %s195
    $region4: #{tpu_custom_call.1} parent=1 // loop_header_branch
      %27 = sbr.rel (%p25) target = $region8
    $region5: #{tpu_custom_call.1} parent=1 // loop_body
      %s29 = ssub.s32 %s24, 1
      %s30 = ssub.s32 %s24, 2
      %s31 = sadd.s32 %s24, 1
      %s32 = ssub.s32 %s24, %s31
      %p33 = scmp.eq.s32.totalorder %s32, 0
      %s35 = sadd.s32 %s34, 1
      %s36 = scalar_select %p33, %s34, %s35
      %p39 = pneg %p33
      %p40 = scmp.eq.s32.totalorder %s24, 1
      %p41 = por %p39, %p40
      %p42 = scmp.ne.s32.totalorder %s34, %s37
      %p43 = scmp.eq.s32.totalorder %s24, 0
      %p44 = por %p42, %p43
      %p45 = scmp.ne.s32.totalorder %s34, %s37
      %p46 = scmp.eq.s32.totalorder %s29, 1
      %p47 = por %p45, %p46
      %p48 = scmp.ne.s32.totalorder %s37, %s38
      %p49 = scmp.eq.s32.totalorder %s29, 0
      %p50 = por %p48, %p49
      %p51 = scmp.ne.s32.totalorder %s37, %s38
      %p52 = scmp.eq.s32.totalorder %s30, 1
      %p53 = por %p51, %p52
      %p55 = scmp.ne.s32.totalorder %s38, %s54
      %p56 = scmp.eq.s32.totalorder %s30, 0
      %p57 = por %p55, %p56
      %s58 = ssub.s32 %s24, %s31
      %p59 = scmp.eq.s32.totalorder %s58, 0
      %s61 = sadd.s32 %s60, 1
      %s62 = scalar_select %p59, %s60, %s61
      %p65 = pneg %p59
      %p66 = scmp.eq.s32.totalorder %s24, 1
      %p67 = por %p65, %p66
      %p68 = scmp.ne.s32.totalorder %s60, %s63
      %p69 = scmp.eq.s32.totalorder %s24, 0
      %p70 = por %p68, %p69
      %p71 = scmp.ne.s32.totalorder %s60, %s63
      %p72 = scmp.eq.s32.totalorder %s29, 1
      %p73 = por %p71, %p72
      %p74 = scmp.ne.s32.totalorder %s63, %s64
      %p75 = scmp.eq.s32.totalorder %s29, 0
      %p76 = por %p74, %p75
      %p77 = scmp.ne.s32.totalorder %s63, %s64
      %p78 = scmp.eq.s32.totalorder %s30, 1
      %p79 = por %p77, %p78
      %p81 = scmp.ne.s32.totalorder %s64, %s80
      %p82 = scmp.eq.s32.totalorder %s30, 0
      %p83 = por %p81, %p82
      %s85 = sadd.s32 %s84, 1
      %p88 = scmp.eq.s32.totalorder %s24, 1
      %p89 = scmp.ne.s32.totalorder %s84, %s86
      %p90 = scmp.eq.s32.totalorder %s24, 0
      %p91 = por %p89, %p90
      %p92 = scmp.ne.s32.totalorder %s84, %s86
      %p93 = scmp.eq.s32.totalorder %s29, 1
      %p94 = por %p92, %p93
      %p95 = scmp.ne.s32.totalorder %s86, %s87
      %p96 = scmp.eq.s32.totalorder %s29, 0
      %p97 = por %p95, %p96
      %p98 = scmp.ne.s32.totalorder %s86, %s87
      %p99 = scmp.eq.s32.totalorder %s30, 1
      %p100 = por %p98, %p99
      %p102 = scmp.ne.s32.totalorder %s87, %s101
      %p103 = scmp.eq.s32.totalorder %s30, 0
      %p104 = por %p102, %p103
      %s106 = sadd.s32 %s105, 1
      %p109 = scmp.eq.s32.totalorder %s24, 1
      %p110 = scmp.ne.s32.totalorder %s105, %s107
      %p111 = scmp.eq.s32.totalorder %s24, 0
      %p112 = por %p110, %p111
      %p113 = scmp.ne.s32.totalorder %s105, %s107
      %p114 = scmp.eq.s32.totalorder %s29, 1
      %p115 = por %p113, %p114
      %p116 = scmp.ne.s32.totalorder %s107, %s108
      %p117 = scmp.eq.s32.totalorder %s29, 0
      %p118 = por %p116, %p117
      %p119 = scmp.ne.s32.totalorder %s107, %s108
      %p120 = scmp.eq.s32.totalorder %s30, 1
      %p121 = por %p119, %p120
      %p123 = scmp.ne.s32.totalorder %s108, %s122
      %p124 = scmp.eq.s32.totalorder %s30, 0
      %p125 = por %p123, %p124
      %s127 = sadd.s32 %s126, 1
      %p130 = scmp.eq.s32.totalorder %s24, 1
      %p131 = scmp.ne.s32.totalorder %s126, %s128
      %p132 = scmp.eq.s32.totalorder %s24, 0
      %p133 = por %p131, %p132
      %p134 = scmp.ne.s32.totalorder %s126, %s128
      %p135 = scmp.eq.s32.totalorder %s29, 1
      %p136 = por %p134, %p135
      %p137 = scmp.ne.s32.totalorder %s128, %s129
      %p138 = scmp.eq.s32.totalorder %s29, 0
      %p139 = por %p137, %p138
      %p140 = scmp.ne.s32.totalorder %s128, %s129
      %p141 = scmp.eq.s32.totalorder %s30, 1
      %p142 = por %p140, %p141
      %p144 = scmp.ne.s32.totalorder %s129, %s143
      %p145 = scmp.eq.s32.totalorder %s30, 0
      %p146 = por %p144, %p145
      %s148 = sadd.s32 %s147, 1
      %p151 = scmp.eq.s32.totalorder %s24, 1
      %p152 = scmp.ne.s32.totalorder %s147, %s149
      %p153 = scmp.eq.s32.totalorder %s24, 0
      %p154 = por %p152, %p153
      %p155 = scmp.ne.s32.totalorder %s147, %s149
      %p156 = scmp.eq.s32.totalorder %s29, 1
      %p157 = por %p155, %p156
      %p158 = scmp.ne.s32.totalorder %s149, %s150
      %p159 = scmp.eq.s32.totalorder %s29, 0
      %p160 = por %p158, %p159
      %p161 = scmp.ne.s32.totalorder %s149, %s150
      %p162 = scmp.eq.s32.totalorder %s30, 1
      %p163 = por %p161, %p162
      %p165 = scmp.ne.s32.totalorder %s150, %s164
      %p166 = scmp.eq.s32.totalorder %s30, 0
      %p167 = por %p165, %p166
      %s169 = sadd.s32 %s168, 1
      %p172 = scmp.eq.s32.totalorder %s24, 1
      %p173 = scmp.ne.s32.totalorder %s168, %s170
      %p174 = scmp.eq.s32.totalorder %s24, 0
      %p175 = por %p173, %p174
      %p176 = scmp.ne.s32.totalorder %s168, %s170
      %p177 = scmp.eq.s32.totalorder %s29, 1
      %p178 = por %p176, %p177
      %p179 = scmp.ne.s32.totalorder %s170, %s171
      %p180 = scmp.eq.s32.totalorder %s29, 0
      %p181 = por %p179, %p180
      %p182 = scmp.ne.s32.totalorder %s170, %s171
      %p183 = scmp.eq.s32.totalorder %s30, 1
      %p184 = por %p182, %p183
      %p186 = scmp.ne.s32.totalorder %s171, %s185
      %p187 = scmp.eq.s32.totalorder %s30, 0
      %p188 = por %p186, %p187
      %s189 = ssub.s32 %s24, %s31
      %p190 = scmp.eq.s32.totalorder %s189, 0
      %s192 = sadd.s32 %s191, 1
      %s193 = scalar_select %p190, %s191, %s192
      %p196 = pneg %p190
      %p197 = scmp.eq.s32.totalorder %s24, 1
      %p198 = por %p196, %p197
      %p199 = scmp.ne.s32.totalorder %s191, %s194
      %p200 = scmp.eq.s32.totalorder %s24, 0
      %p201 = por %p199, %p200
      %p202 = scmp.ne.s32.totalorder %s191, %s194
      %p203 = scmp.eq.s32.totalorder %s29, 1
      %p204 = por %p202, %p203
      %p205 = scmp.ne.s32.totalorder %s194, %s195
      %p206 = scmp.eq.s32.totalorder %s29, 0
      %p207 = por %p205, %p206
      %p208 = scmp.ne.s32.totalorder %s194, %s195
      %p209 = scmp.eq.s32.totalorder %s30, 1
      %p210 = por %p208, %p209
      %p212 = scmp.ne.s32.totalorder %s195, %s211
      %p213 = scmp.eq.s32.totalorder %s30, 0
      %p214 = por %p212, %p213
      %p215 = scmp.le.s32.totalorder 1, %s24
      %p216 = scmp.lt.s32.totalorder %s24, 3
      %p217 = pnand %p215, %p216
      %p218 = pneg %p217
      // Predicated region
      $region9: #{tpu_custom_call.1} parent=5 // pred_check
        _
      $region10: #{tpu_custom_call.1} parent=5 // pred_check_branch
        %220 = sbr.rel (%p217) target = $region12
      $region11: #{tpu_custom_call.1} parent=5 // pred_region
        %s221 = ssub.s32 %s24, 1
        // Predicated region
        $region13: #{tpu_custom_call.1} parent=11 // pred_check
          %p222 = pneg %p97
        $region14: #{tpu_custom_call.1} parent=11 // pred_check_branch
          %224 = sbr.rel (%p222) target = $region16
        $region15: #{tpu_custom_call.1} parent=11 // pred_region
          %226 = vsyncadd [#allocation6], 0
          %s227 = sshll.u32 %s2, 4
          %s228 = int_to_ptr.hbm [resolvable:$true] %s227
          %s229 = sshll.u32 [#allocation7], 4
          %s230 = int_to_ptr.vmem [resolvable:$true] %s229
          %235 = dma.hbm_to_vmem [thread:$0]  %s228, 512, %s230, [#allocation6], 64, 64, 4
        $region16: #{tpu_custom_call.1} parent=11 // pred_fallthru
          _
        // Predicated region
        $region17: #{tpu_custom_call.1} parent=11 // pred_check
          %p236 = pneg %p118
        $region18: #{tpu_custom_call.1} parent=11 // pred_check_branch
          %238 = sbr.rel (%p236) target = $region20
        $region19: #{tpu_custom_call.1} parent=11 // pred_region
          %240 = vsyncadd [#allocation9], 0
          %s242 = sshll.u32 %s3, 4
          %s243 = int_to_ptr.hbm [resolvable:$true] %s242
          %s244 = sshll.u32 [#allocation8], 4
          %s245 = int_to_ptr.vmem [resolvable:$true] %s244
          %247 = dma.hbm_to_vmem [thread:$0]  %s243, 64, %s245, [#allocation9]
        $region20: #{tpu_custom_call.1} parent=11 // pred_fallthru
          _
        // Predicated region
        $region21: #{tpu_custom_call.1} parent=11 // pred_check
          %p248 = pneg %p139
        $region22: #{tpu_custom_call.1} parent=11 // pred_check_branch
          %250 = sbr.rel (%p248) target = $region24
        $region23: #{tpu_custom_call.1} parent=11 // pred_region
          %252 = vsyncadd [#allocation9], 0
          %s254 = sshll.u32 %s4, 4
          %s255 = int_to_ptr.hbm [resolvable:$true] %s254
          %s256 = sshll.u32 [#allocation10], 4
          %s257 = int_to_ptr.vmem [resolvable:$true] %s256
          %259 = dma.hbm_to_vmem [thread:$0]  %s255, 64, %s257, [#allocation9]
        $region24: #{tpu_custom_call.1} parent=11 // pred_fallthru
          _
        // Predicated region
        $region25: #{tpu_custom_call.1} parent=11 // pred_check
          %p260 = pneg %p160
        $region26: #{tpu_custom_call.1} parent=11 // pred_check_branch
          %262 = sbr.rel (%p260) target = $region28
        $region27: #{tpu_custom_call.1} parent=11 // pred_region
          _
        $region28: #{tpu_custom_call.1} parent=11 // pred_fallthru
          _
        // Predicated region
        $region29: #{tpu_custom_call.1} parent=11 // pred_check
          %p263 = pneg %p181
        $region30: #{tpu_custom_call.1} parent=11 // pred_check_branch
          %265 = sbr.rel (%p263) target = $region32
        $region31: #{tpu_custom_call.1} parent=11 // pred_region
          %267 = vsyncadd [#allocation12], 0
          %s268 = sshll.u32 %s6, 4
          %s269 = int_to_ptr.hbm [resolvable:$true] %s268
          %s270 = sshll.u32 [#allocation11], 4
          %s271 = int_to_ptr.vmem [resolvable:$true] %s270
          %276 = dma.hbm_to_vmem [thread:$0]  %s269, 256, %s271, [#allocation12], 64, 64, 4
        $region32: #{tpu_custom_call.1} parent=11 // pred_fallthru
          _
      $region12: #{tpu_custom_call.1} parent=5 // pred_fallthru
        _
      %p277 = scmp.lt.s32.totalorder %s24, 2
      // Predicated region
      $region33: #{tpu_custom_call.1} parent=5 // pred_check
        %p278 = pneg %p277
      $region34: #{tpu_custom_call.1} parent=5 // pred_check_branch
        %280 = sbr.rel (%p278) target = $region36
      $region35: #{tpu_custom_call.1} parent=5 // pred_region
        // Predicated region
        $region37: #{tpu_custom_call.1} parent=35 // pred_check
          %p281 = pneg %p44
        $region38: #{tpu_custom_call.1} parent=35 // pred_check_branch
          %283 = sbr.rel (%p281) target = $region40
        $region39: #{tpu_custom_call.1} parent=35 // pred_region
          %s284 = sand.u32 %s34, 1
          %s285 = scalar_lea.sflag [#allocation3], %s284
          %s286 = sand.u32 %s34, 1
          %s287 = smul.addr %s286, 4
          %s288 = scalar_lea.vmem [#allocation2], %s287
          %290 = vsyncadd %s285, 0
          %s291 = smul.addr %s24, 4
          %s292 = scalar_lea.hbm %s0, %s291
          %s294 = sshll.u32 %s292, 4
          %s295 = int_to_ptr.hbm [resolvable:$true] %s294
          %s296 = sshll.u32 %s288, 4
          %s297 = int_to_ptr.vmem [resolvable:$true] %s296
          %299 = dma.hbm_to_vmem [thread:$0]  %s295, 64, %s297, %s285
        $region40: #{tpu_custom_call.1} parent=35 // pred_fallthru
          _
        // Predicated region
        $region41: #{tpu_custom_call.1} parent=35 // pred_check
          %p300 = pneg %p70
        $region42: #{tpu_custom_call.1} parent=35 // pred_check_branch
          %302 = sbr.rel (%p300) target = $region44
        $region43: #{tpu_custom_call.1} parent=35 // pred_region
          %s303 = sand.u32 %s24, 1
          %s304 = scalar_lea.sflag [#allocation6], %s303
          %s305 = sand.u32 %s60, 1
          %s306 = scalar_lea.vmem [#allocation5], %s305
          %308 = vsyncadd %s304, 0
          %s309 = scalar_lea.hbm %s1, %s24
          %s311 = sshll.u32 %s309, 4
          %s312 = int_to_ptr.hbm [resolvable:$true] %s311
          %s313 = sshll.u32 %s306, 4
          %s314 = int_to_ptr.vmem [resolvable:$true] %s313
          %316 = dma.hbm_to_vmem [thread:$0]  %s312, 16, %s314, %s304
        $region44: #{tpu_custom_call.1} parent=35 // pred_fallthru
          _
      $region36: #{tpu_custom_call.1} parent=5 // pred_fallthru
        _
      %p317 = scmp.le.s32.totalorder 1, %s24
      %p318 = scmp.lt.s32.totalorder %s24, 3
      %p319 = pnand %p317, %p318
      %p320 = pneg %p319
      // Predicated region
      $region45: #{tpu_custom_call.1} parent=5 // pred_check
        _
      $region46: #{tpu_custom_call.1} parent=5 // pred_check_branch
        %322 = sbr.rel (%p319) target = $region48
      $region47: #{tpu_custom_call.1} parent=5 // pred_region
        %s323 = ssub.s32 %s24, 1
        %s324 = sand.u32 %s37, 1
        %s325 = scalar_lea.sflag [#allocation3], %s324
        %s326 = sand.u32 %s37, 1
        %s327 = smul.addr %s326, 4
        %s328 = scalar_lea.vmem [#allocation2], %s327
        // Predicated region
        $region49: #{tpu_custom_call.1} parent=47 // pred_check
          %p329 = pneg %p50
        $region50: #{tpu_custom_call.1} parent=47 // pred_check_branch
          %331 = sbr.rel (%p329) target = $region52
        $region51: #{tpu_custom_call.1} parent=47 // pred_region
          %333 = dma.done %s325, 64
        $region52: #{tpu_custom_call.1} parent=47 // pred_fallthru
          _
        %s334 = sand.u32 %s29, 1
        %s335 = scalar_lea.sflag [#allocation6], %s334
        %s336 = sand.u32 %s63, 1
        %s337 = scalar_lea.vmem [#allocation5], %s336
        // Predicated region
        $region53: #{tpu_custom_call.1} parent=47 // pred_check
          %p338 = pneg %p76
        $region54: #{tpu_custom_call.1} parent=47 // pred_check_branch
          %340 = sbr.rel (%p338) target = $region56
        $region55: #{tpu_custom_call.1} parent=47 // pred_region
          %342 = dma.done %s335, 16
        $region56: #{tpu_custom_call.1} parent=47 // pred_fallthru
          _
        // Predicated region
        $region57: #{tpu_custom_call.1} parent=47 // pred_check
          %p343 = pneg %p97
        $region58: #{tpu_custom_call.1} parent=47 // pred_check_branch
          %345 = sbr.rel (%p343) target = $region60
        $region59: #{tpu_custom_call.1} parent=47 // pred_region
          %347 = dma.done [#allocation6], 512
        $region60: #{tpu_custom_call.1} parent=47 // pred_fallthru
          _
        // Predicated region
        $region61: #{tpu_custom_call.1} parent=47 // pred_check
          %p348 = pneg %p118
        $region62: #{tpu_custom_call.1} parent=47 // pred_check_branch
          %350 = sbr.rel (%p348) target = $region64
        $region63: #{tpu_custom_call.1} parent=47 // pred_region
          %352 = dma.done [#allocation9], 64
        $region64: #{tpu_custom_call.1} parent=47 // pred_fallthru
          _
        // Predicated region
        $region65: #{tpu_custom_call.1} parent=47 // pred_check
          %p353 = pneg %p139
        $region66: #{tpu_custom_call.1} parent=47 // pred_check_branch
          %355 = sbr.rel (%p353) target = $region68
        $region67: #{tpu_custom_call.1} parent=47 // pred_region
          %357 = dma.done [#allocation9], 64
        $region68: #{tpu_custom_call.1} parent=47 // pred_fallthru
          _
        // Predicated region
        $region69: #{tpu_custom_call.1} parent=47 // pred_check
          %p358 = pneg %p181
        $region70: #{tpu_custom_call.1} parent=47 // pred_check_branch
          %360 = sbr.rel (%p358) target = $region72
        $region71: #{tpu_custom_call.1} parent=47 // pred_region
          %362 = dma.done [#allocation12], 256
        $region72: #{tpu_custom_call.1} parent=47 // pred_fallthru
          _
        %s363 = sand.u32 %s37, 1
        %s364 = scalar_lea.sflag [#allocation3], %s363
        %s365 = sand.u32 %s37, 1
        %s366 = smul.addr %s365, 4
        %s367 = scalar_lea.vmem [#allocation2], %s366
        %p368 = pneg %p50
        %p369 = pneg %p47
        %s370 = sand.u32 %s29, 1
        %s371 = scalar_lea.sflag [#allocation6], %s370
        %s372 = sand.u32 %s63, 1
        %s373 = scalar_lea.vmem [#allocation5], %s372
        %p374 = pneg %p76
        %p375 = pneg %p73
        %p376 = pneg %p97
        %p377 = pneg %p94
        %p378 = pneg %p118
        %p379 = pneg %p115
        %p380 = pneg %p139
        %p381 = pneg %p136
        %p382 = pneg %p160
        %p383 = pneg %p157
        %p384 = pneg %p181
        %p385 = pneg %p178
        %p386 = pneg %p207
        %p387 = pneg %p204
        %s388 = sand.u32 %s194, 1
        %s389 = scalar_lea.sflag [#allocation4], %s388
        %s390 = sand.u32 %s194, 1
        %s391 = smul.addr %s390, 8
        %s392 = scalar_lea.vmem [#allocation13], %s391
        %v394 = vld [vmem:[%s328] sm:$0xf]
        %v395 = vld [vmem:[%s337] sm:$0x1]
        %v396 = vld [vmem:[%s5] sm:$0xf]
        %v397 = vld [vmem:[#allocation8] sm:$0xf]
        %v398 = vld [vmem:[#allocation10] sm:$0xf]
        %v399 = vld [vmem:[#allocation7] sm:$0xf]
        %v400 = vld [vmem:[#allocation7 + $0x4] sm:$0xf]
        %v401 = vld [vmem:[#allocation7 + $0x8] sm:$0xf]
        %v402 = vld [vmem:[#allocation7 + $0xc] sm:$0xf]
        %v403 = vld [vmem:[#allocation7 + $0x10] sm:$0xf]
        %v404 = vld [vmem:[#allocation7 + $0x14] sm:$0xf]
        %v405 = vld [vmem:[#allocation7 + $0x18] sm:$0xf]
        %v406 = vld [vmem:[#allocation7 + $0x1c] sm:$0xf]
        %v415 = vunpack.c.l.b16 %v399
        %v416 = vunpack.c.l.b16 %v400
        %v417 = vunpack.c.l.b16 %v401
        %v418 = vunpack.c.l.b16 %v402
        %v419 = vunpack.c.l.b16 %v403
        %v420 = vunpack.c.l.b16 %v404
        %v421 = vunpack.c.l.b16 %v405
        %v422 = vunpack.c.l.b16 %v406
        %v423 = vpack.c.b16 %v416, %v415
        %v424 = vpack.c.b16 %v418, %v417
        %v425 = vpack.c.b16 %v420, %v419
        %v426 = vpack.c.b16 %v422, %v421
        %vm431 = vcmask 523264
        %v433 = vsel %vm431, %v394, 0
        %435 = vmatpush.bf16.msra.mxu0 0
        %436 = vmatpush.bf16.msra.mxu0 0
        %437 = vmatpush.bf16.msra.mxu0 0
        %438 = vmatpush.bf16.msra.mxu0 0
        %439 = vmatpush.bf16.msra.mxu0 %v426
        %440 = vmatpush.bf16.msra.mxu0 %v425
        %441 = vmatpush.bf16.msra.mxu0 %v424
        %442 = vmatpush.bf16.msra.mxu0 %v423
        %443 = vmatmul.bf16.gmra.mxu0 %v433
        %v444 = vpop.f32.mrf.mxu0
        %v445 = vadd.f32 0.0, %v444
        %v446 = vpop.f32.mrf.mxu0
        %447 = vdwg.mxu0
        %v448 = vlaneseq
        %v449 = vshrl.u32 %v448, 7
        %v450 = vsub.s32 7, %v449
        %v451 = vand.u32 %v450, 1
        %vm452 = vcmp.ne.s32.totalorder %v451, 0
        %v453 = vshra.s32 %v450, 1
        %v454 = vand.u32 %v453, 1
        %vm455 = vcmp.ne.s32.totalorder %v454, 0
        %v456 = vshra.s32 %v450, 2
        %v457 = vand.u32 %v456, 1
        %vm458 = vcmp.ne.s32.totalorder %v457, 0
        %v459 = vperm.slane %v397, 0
        %v460 = vadd.f32 %v445, %v459
        %v461 = vpack.c.bf16 %v460, %v460
        %v462 = vpack.c.bf16 %v445, %v445
        %v463 = vperm.slane %v398, 0
        %v464 = vadd.f32 %v445, %v463
        %v465 = vpack.c.bf16 %v464, %v464
        %vm466 = vcmask 64512
        %v468 = vsel %vm466, %v465, 0
        %vm470 = vcmask 1043456
        %v472 = vsel %vm470, %v396, 0
        %474 = vmatpush.bf16.msra.mxu0 0
        %475 = vmatpush.bf16.msra.mxu0 0
        %476 = vmatpush.bf16.msra.mxu0 0
        %477 = vmatpush.bf16.msra.mxu0 0
        %478 = vmatpush.bf16.msra.mxu0 0
        %479 = vmatpush.bf16.msra.mxu0 0
        %480 = vmatpush.bf16.msra.mxu0 0
        %481 = vmatpush.bf16.msra.mxu0 %v472
        %482 = vmatmul.bf16.gmra.mxu0 %v468
        %v483 = vpop.f32.mrf.mxu0
        %v484 = vadd.f32 0.0, %v483
        %v485 = vpop.f32.mrf.mxu0
        %486 = vdwg.mxu0
        %488 = vrot.lane.b32.xlu0 %v484, 127
        %v489 = vpop.permute.xlu0 %488
        %vm491 = vcmask 1039360
        %v492 = vsel %vm491, %v489, 0.0
        %v493 = vsel %vm452, 1, 0
        %vm494 = vcmp.eq.s32.totalorder %v493, 1
        %v495 = vsel %vm494, %v492, %v484
        %497 = vrot.lane.b32.xlu0 %v495, 126
        %v498 = vpop.permute.xlu0 %497
        %vm500 = vcmask 1031168
        %v501 = vsel %vm500, %v498, 0.0
        %v502 = vsel %vm455, 1, 0
        %vm503 = vcmp.eq.s32.totalorder %v502, 1
        %v504 = vsel %vm503, %v501, %v495
        %506 = vrot.lane.b32.xlu0 %v504, 124
        %v507 = vpop.permute.xlu0 %506
        %vm509 = vcmask 1014784
        %v510 = vsel %vm509, %v507, 0.0
        %v511 = vsel %vm458, 1, 0
        %vm512 = vcmp.eq.s32.totalorder %v511, 1
        %v513 = vsel %vm512, %v510, %v504
        %515 = vrot.lane.b32.xlu0 %v462, 96
        %v516 = vpop.permute.xlu0 %515
        %v518 = vsel %vm466, %v461, 0
        %v521 = vsel %vm466, %v516, 0
        %523 = vmatpush.bf16.xpose.msra.mxu0 0
        %524 = vmatpush.bf16.xpose.msra.mxu0 0
        %525 = vmatpush.bf16.xpose.msra.mxu0 0
        %526 = vmatpush.bf16.xpose.msra.mxu0 0
        %527 = vmatpush.bf16.xpose.msra.mxu0 0
        %528 = vmatpush.bf16.xpose.msra.mxu0 0
        %529 = vmatpush.bf16.xpose.msra.mxu0 0
        %530 = vmatpush.bf16.xpose.msra.mxu0 %v521
        %531 = vmatmul.bf16.gmra.mxu0 %v518
        %v532 = vpop.f32.mrf.mxu0
        %v533 = vadd.f32 %v513, %v532
        %v534 = vpop.f32.mrf.mxu0
        %535 = vdwg.mxu0
        %v537 = vperm.slane %v395, 0
        %v539 = vadd.f32 %v533, %v537
        %v540 = vsel %vm466, %v539, -inf
        %541 = vmax.xlane.f32.xlu0 %v540
        %v542 = vpop.xlane.xlu0 %541
        %v543 = vsub.f32 %v539, %v542
        %v544 = vmul.f32 %v543, 1.442695
        %v545 = vpow.pop %v544
        %v546 = vsel %vm466, %v545, 0.0
        %547 = vadd.xlane.f32.xlu0 %v546
        %v548 = vpop.xlane.xlu0 %547
        %v549 = vrcp.pop %v548
        %v550 = vmul.f32 %v545, %v549
        %v551 = vpack.c.bf16 %v550, %v550
        %552 = vrot.lane.b32.xlu0 %v462, 64
        %v553 = vpop.permute.xlu0 %552
        %v555 = vsel %vm466, %v551, 0
        %v558 = vsel %vm470, %v553, 0
        %560 = vmatpush.bf16.msra.mxu0 0
        %561 = vmatpush.bf16.msra.mxu0 0
        %562 = vmatpush.bf16.msra.mxu0 0
        %563 = vmatpush.bf16.msra.mxu0 0
        %564 = vmatpush.bf16.msra.mxu0 0
        %565 = vmatpush.bf16.msra.mxu0 0
        %566 = vmatpush.bf16.msra.mxu0 0
        %567 = vmatpush.bf16.msra.mxu0 %v558
        %568 = vmatmul.bf16.gmra.mxu0 %v555
        %v569 = vpop.f32.mrf.mxu0
        %v570 = vadd.f32 0.0, %v569
        %v571 = vpop.f32.mrf.mxu0
        %572 = vdwg.mxu0
        %v573 = vperm.slane %v397, 1
        %575 = vrot.lane.b32.xlu0 %v573, 8
        %v576 = vpop.permute.xlu0 %575
        %v578 = vadd.f32 %v445, %v576
        %v579 = vpack.c.bf16 %v578, %v578
        %v580 = vperm.slane %v398, 1
        %582 = vrot.lane.b32.xlu0 %v580, 8
        %v583 = vpop.permute.xlu0 %582
        %v585 = vadd.f32 %v445, %v583
        %v586 = vpack.c.bf16 %v585, %v585
        %588 = vrot.lane.b32.xlu0 %v586, 120
        %v589 = vpop.permute.xlu0 %588
        %v591 = vsel %vm466, %v589, 0
        %593 = vmatpush.bf16.msra.mxu0 0
        %594 = vmatpush.bf16.msra.mxu0 0
        %595 = vmatpush.bf16.msra.mxu0 0
        %596 = vmatpush.bf16.msra.mxu0 0
        %597 = vmatpush.bf16.msra.mxu0 0
        %598 = vmatpush.bf16.msra.mxu0 0
        %599 = vmatpush.bf16.msra.mxu0 0
        %600 = vmatpush.bf16.msra.mxu0 %v472
        %601 = vmatmul.bf16.gmra.mxu0 %v591
        %v602 = vpop.f32.mrf.mxu0
        %v603 = vadd.f32 0.0, %v602
        %v604 = vpop.f32.mrf.mxu0
        %605 = vdwg.mxu0
        %607 = vrot.lane.b32.xlu0 %v603, 127
        %v608 = vpop.permute.xlu0 %607
        %v610 = vsel %vm491, %v608, 0.0
        %v611 = vsel %vm494, %v610, %v603
        %613 = vrot.lane.b32.xlu0 %v611, 126
        %v614 = vpop.permute.xlu0 %613
        %v616 = vsel %vm500, %v614, 0.0
        %v617 = vsel %vm503, %v616, %v611
        %619 = vrot.lane.b32.xlu0 %v617, 124
        %v620 = vpop.permute.xlu0 %619
        %v622 = vsel %vm509, %v620, 0.0
        %v623 = vsel %vm512, %v622, %v617
        %625 = vrot.lane.b32.xlu0 %v579, 120
        %v626 = vpop.permute.xlu0 %625
        %627 = vrot.lane.b32.xlu0 %v462, 88
        %v628 = vpop.permute.xlu0 %627
        %v630 = vsel %vm466, %v626, 0
        %v633 = vsel %vm466, %v628, 0
        %635 = vmatpush.bf16.xpose.msra.mxu0 0
        %636 = vmatpush.bf16.xpose.msra.mxu0 0
        %637 = vmatpush.bf16.xpose.msra.mxu0 0
        %638 = vmatpush.bf16.xpose.msra.mxu0 0
        %639 = vmatpush.bf16.xpose.msra.mxu0 0
        %640 = vmatpush.bf16.xpose.msra.mxu0 0
        %641 = vmatpush.bf16.xpose.msra.mxu0 0
        %642 = vmatpush.bf16.xpose.msra.mxu0 %v633
        %643 = vmatmul.bf16.gmra.mxu0 %v630
        %v644 = vpop.f32.mrf.mxu0
        %v645 = vadd.f32 %v623, %v644
        %v646 = vpop.f32.mrf.mxu0
        %647 = vdwg.mxu0
        %v648 = vadd.f32 %v645, %v537
        %v649 = vsel %vm466, %v648, -inf
        %650 = vmax.xlane.f32.xlu0 %v649
        %v651 = vpop.xlane.xlu0 %650
        %v652 = vsub.f32 %v648, %v651
        %v653 = vmul.f32 %v652, 1.442695
        %v654 = vpow.pop %v653
        %v655 = vsel %vm466, %v654, 0.0
        %656 = vadd.xlane.f32.xlu0 %v655
        %v657 = vpop.xlane.xlu0 %656
        %v658 = vrcp.pop %v657
        %v659 = vmul.f32 %v654, %v658
        %v660 = vpack.c.bf16 %v659, %v659
        %661 = vrot.lane.b32.xlu0 %v462, 56
        %v662 = vpop.permute.xlu0 %661
        %v664 = vsel %vm466, %v660, 0
        %v667 = vsel %vm470, %v662, 0
        %669 = vmatpush.bf16.msra.mxu0 0
        %670 = vmatpush.bf16.msra.mxu0 0
        %671 = vmatpush.bf16.msra.mxu0 0
        %672 = vmatpush.bf16.msra.mxu0 0
        %673 = vmatpush.bf16.msra.mxu0 0
        %674 = vmatpush.bf16.msra.mxu0 0
        %675 = vmatpush.bf16.msra.mxu0 0
        %676 = vmatpush.bf16.msra.mxu0 %v667
        %677 = vmatmul.bf16.gmra.mxu0 %v664
        %v678 = vpop.f32.mrf.mxu0
        %v679 = vadd.f32 0.0, %v678
        %v680 = vpop.f32.mrf.mxu0
        %681 = vdwg.mxu0
        %v682 = vperm.slane %v397, 2
        %684 = vrot.lane.b32.xlu0 %v682, 16
        %v685 = vpop.permute.xlu0 %684
        %v687 = vadd.f32 %v445, %v685
        %v688 = vpack.c.bf16 %v687, %v687
        %v689 = vperm.slane %v398, 2
        %691 = vrot.lane.b32.xlu0 %v689, 16
        %v692 = vpop.permute.xlu0 %691
        %v694 = vadd.f32 %v445, %v692
        %v695 = vpack.c.bf16 %v694, %v694
        %697 = vrot.lane.b32.xlu0 %v695, 112
        %v698 = vpop.permute.xlu0 %697
        %v700 = vsel %vm466, %v698, 0
        %702 = vmatpush.bf16.msra.mxu0 0
        %703 = vmatpush.bf16.msra.mxu0 0
        %704 = vmatpush.bf16.msra.mxu0 0
        %705 = vmatpush.bf16.msra.mxu0 0
        %706 = vmatpush.bf16.msra.mxu0 0
        %707 = vmatpush.bf16.msra.mxu0 0
        %708 = vmatpush.bf16.msra.mxu0 0
        %709 = vmatpush.bf16.msra.mxu0 %v472
        %710 = vmatmul.bf16.gmra.mxu0 %v700
        %v711 = vpop.f32.mrf.mxu0
        %v712 = vadd.f32 0.0, %v711
        %v713 = vpop.f32.mrf.mxu0
        %714 = vdwg.mxu0
        %716 = vrot.lane.b32.xlu0 %v712, 127
        %v717 = vpop.permute.xlu0 %716
        %v719 = vsel %vm491, %v717, 0.0
        %v720 = vsel %vm494, %v719, %v712
        %722 = vrot.lane.b32.xlu0 %v720, 126
        %v723 = vpop.permute.xlu0 %722
        %v725 = vsel %vm500, %v723, 0.0
        %v726 = vsel %vm503, %v725, %v720
        %728 = vrot.lane.b32.xlu0 %v726, 124
        %v729 = vpop.permute.xlu0 %728
        %v731 = vsel %vm509, %v729, 0.0
        %v732 = vsel %vm512, %v731, %v726
        %734 = vrot.lane.b32.xlu0 %v688, 112
        %v735 = vpop.permute.xlu0 %734
        %736 = vrot.lane.b32.xlu0 %v462, 80
        %v737 = vpop.permute.xlu0 %736
        %v739 = vsel %vm466, %v735, 0
        %v742 = vsel %vm466, %v737, 0
        %744 = vmatpush.bf16.xpose.msra.mxu0 0
        %745 = vmatpush.bf16.xpose.msra.mxu0 0
        %746 = vmatpush.bf16.xpose.msra.mxu0 0
        %747 = vmatpush.bf16.xpose.msra.mxu0 0
        %748 = vmatpush.bf16.xpose.msra.mxu0 0
        %749 = vmatpush.bf16.xpose.msra.mxu0 0
        %750 = vmatpush.bf16.xpose.msra.mxu0 0
        %751 = vmatpush.bf16.xpose.msra.mxu0 %v742
        %752 = vmatmul.bf16.gmra.mxu0 %v739
        %v753 = vpop.f32.mrf.mxu0
        %v754 = vadd.f32 %v732, %v753
        %v755 = vpop.f32.mrf.mxu0
        %756 = vdwg.mxu0
        %v757 = vadd.f32 %v754, %v537
        %v758 = vsel %vm466, %v757, -inf
        %759 = vmax.xlane.f32.xlu0 %v758
        %v760 = vpop.xlane.xlu0 %759
        %v761 = vsub.f32 %v757, %v760
        %v762 = vmul.f32 %v761, 1.442695
        %v763 = vpow.pop %v762
        %v764 = vsel %vm466, %v763, 0.0
        %765 = vadd.xlane.f32.xlu0 %v764
        %v766 = vpop.xlane.xlu0 %765
        %v767 = vrcp.pop %v766
        %v768 = vmul.f32 %v763, %v767
        %v769 = vpack.c.bf16 %v768, %v768
        %770 = vrot.lane.b32.xlu0 %v462, 48
        %v771 = vpop.permute.xlu0 %770
        %v773 = vsel %vm466, %v769, 0
        %v776 = vsel %vm470, %v771, 0
        %778 = vmatpush.bf16.msra.mxu0 0
        %779 = vmatpush.bf16.msra.mxu0 0
        %780 = vmatpush.bf16.msra.mxu0 0
        %781 = vmatpush.bf16.msra.mxu0 0
        %782 = vmatpush.bf16.msra.mxu0 0
        %783 = vmatpush.bf16.msra.mxu0 0
        %784 = vmatpush.bf16.msra.mxu0 0
        %785 = vmatpush.bf16.msra.mxu0 %v776
        %786 = vmatmul.bf16.gmra.mxu0 %v773
        %v787 = vpop.f32.mrf.mxu0
        %v788 = vadd.f32 0.0, %v787
        %v789 = vpop.f32.mrf.mxu0
        %790 = vdwg.mxu0
        %v791 = vperm.slane %v397, 3
        %793 = vrot.lane.b32.xlu0 %v791, 24
        %v794 = vpop.permute.xlu0 %793
        %v796 = vadd.f32 %v445, %v794
        %v797 = vpack.c.bf16 %v796, %v796
        %v798 = vperm.slane %v398, 3
        %800 = vrot.lane.b32.xlu0 %v798, 24
        %v801 = vpop.permute.xlu0 %800
        %v803 = vadd.f32 %v445, %v801
        %v804 = vpack.c.bf16 %v803, %v803
        %806 = vrot.lane.b32.xlu0 %v804, 104
        %v807 = vpop.permute.xlu0 %806
        %v809 = vsel %vm466, %v807, 0
        %811 = vmatpush.bf16.msra.mxu0 0
        %812 = vmatpush.bf16.msra.mxu0 0
        %813 = vmatpush.bf16.msra.mxu0 0
        %814 = vmatpush.bf16.msra.mxu0 0
        %815 = vmatpush.bf16.msra.mxu0 0
        %816 = vmatpush.bf16.msra.mxu0 0
        %817 = vmatpush.bf16.msra.mxu0 0
        %818 = vmatpush.bf16.msra.mxu0 %v472
        %819 = vmatmul.bf16.gmra.mxu0 %v809
        %v820 = vpop.f32.mrf.mxu0
        %v821 = vadd.f32 0.0, %v820
        %v822 = vpop.f32.mrf.mxu0
        %823 = vdwg.mxu0
        %825 = vrot.lane.b32.xlu0 %v821, 127
        %v826 = vpop.permute.xlu0 %825
        %v828 = vsel %vm491, %v826, 0.0
        %v829 = vsel %vm494, %v828, %v821
        %831 = vrot.lane.b32.xlu0 %v829, 126
        %v832 = vpop.permute.xlu0 %831
        %v834 = vsel %vm500, %v832, 0.0
        %v835 = vsel %vm503, %v834, %v829
        %837 = vrot.lane.b32.xlu0 %v835, 124
        %v838 = vpop.permute.xlu0 %837
        %v840 = vsel %vm509, %v838, 0.0
        %v841 = vsel %vm512, %v840, %v835
        %843 = vrot.lane.b32.xlu0 %v797, 104
        %v844 = vpop.permute.xlu0 %843
        %845 = vrot.lane.b32.xlu0 %v462, 72
        %v846 = vpop.permute.xlu0 %845
        %v848 = vsel %vm466, %v844, 0
        %v851 = vsel %vm466, %v846, 0
        %853 = vmatpush.bf16.xpose.msra.mxu0 0
        %854 = vmatpush.bf16.xpose.msra.mxu0 0
        %855 = vmatpush.bf16.xpose.msra.mxu0 0
        %856 = vmatpush.bf16.xpose.msra.mxu0 0
        %857 = vmatpush.bf16.xpose.msra.mxu0 0
        %858 = vmatpush.bf16.xpose.msra.mxu0 0
        %859 = vmatpush.bf16.xpose.msra.mxu0 0
        %860 = vmatpush.bf16.xpose.msra.mxu0 %v851
        %861 = vmatmul.bf16.gmra.mxu0 %v848
        %v862 = vpop.f32.mrf.mxu0
        %v863 = vadd.f32 %v841, %v862
        %v864 = vpop.f32.mrf.mxu0
        %865 = vdwg.mxu0
        %v866 = vadd.f32 %v863, %v537
        %v867 = vsel %vm466, %v866, -inf
        %868 = vmax.xlane.f32.xlu0 %v867
        %v869 = vpop.xlane.xlu0 %868
        %v870 = vsub.f32 %v866, %v869
        %v871 = vmul.f32 %v870, 1.442695
        %v872 = vpow.pop %v871
        %v873 = vsel %vm466, %v872, 0.0
        %874 = vadd.xlane.f32.xlu0 %v873
        %v875 = vpop.xlane.xlu0 %874
        %v876 = vrcp.pop %v875
        %v877 = vmul.f32 %v872, %v876
        %v878 = vpack.c.bf16 %v877, %v877
        %879 = vrot.lane.b32.xlu0 %v462, 40
        %v880 = vpop.permute.xlu0 %879
        %v882 = vsel %vm466, %v878, 0
        %v885 = vsel %vm470, %v880, 0
        %887 = vmatpush.bf16.msra.mxu0 0
        %888 = vmatpush.bf16.msra.mxu0 0
        %889 = vmatpush.bf16.msra.mxu0 0
        %890 = vmatpush.bf16.msra.mxu0 0
        %891 = vmatpush.bf16.msra.mxu0 0
        %892 = vmatpush.bf16.msra.mxu0 0
        %893 = vmatpush.bf16.msra.mxu0 0
        %894 = vmatpush.bf16.msra.mxu0 %v885
        %895 = vmatmul.bf16.gmra.mxu0 %v882
        %v896 = vpop.f32.mrf.mxu0
        %v897 = vadd.f32 0.0, %v896
        %v898 = vpop.f32.mrf.mxu0
        %899 = vdwg.mxu0
        %901 = vrot.lane.b32.xlu0 %v679, 8
        %v902 = vpop.permute.xlu0 %901
        %905 = vrot.lane.b32.xlu0 %v788, 16
        %v906 = vpop.permute.xlu0 %905
        %909 = vrot.lane.b32.xlu0 %v897, 24
        %v910 = vpop.permute.xlu0 %909
        %v912 = vsel %vm466, %v570, %v902
        %vm913 = vcmask 130048
        %v914 = vsel %vm913, %v912, %v906
        %vm915 = vcmask 195584
        %v916 = vsel %vm915, %v914, %v910
        %v917 = vpack.c.bf16 %v916, %v916
        %v918 = vld [vmem:[#allocation11] sm:$0xf]
        %v919 = vld [vmem:[#allocation11 + $0x4] sm:$0xf]
        %v920 = vld [vmem:[#allocation11 + $0x8] sm:$0xf]
        %v921 = vld [vmem:[#allocation11 + $0xc] sm:$0xf]
        %v926 = vunpack.c.l.b16 %v918
        %v927 = vunpack.c.l.b16 %v919
        %v928 = vunpack.c.l.b16 %v920
        %v929 = vunpack.c.l.b16 %v921
        %v930 = vpack.c.b16 %v927, %v926
        %v931 = vpack.c.b16 %v929, %v928
        %vm934 = vcmask 261120
        %v936 = vsel %vm934, %v917, 0
        %938 = vmatpush.bf16.msra.mxu0 0
        %939 = vmatpush.bf16.msra.mxu0 0
        %940 = vmatpush.bf16.msra.mxu0 0
        %941 = vmatpush.bf16.msra.mxu0 0
        %942 = vmatpush.bf16.msra.mxu0 0
        %943 = vmatpush.bf16.msra.mxu0 0
        %944 = vmatpush.bf16.msra.mxu0 %v931
        %945 = vmatpush.bf16.msra.mxu0 %v930
        %946 = vmatmul.bf16.gmra.mxu0 %v936
        %v947 = vpop.f32.mrf.mxu0
        %v948 = vadd.f32 0.0, %v947
        %v949 = vpop.f32.mrf.mxu0
        %950 = vdwg.mxu0
        %951 = vst [vmem:[%s392] sm:$0xff] %v948
        %s952 = sand.u32 %s194, 1
        %s953 = scalar_lea.sflag [#allocation4], %s952
        %s954 = sand.u32 %s194, 1
        %s955 = smul.addr %s954, 8
        %s956 = scalar_lea.vmem [#allocation13], %s955
        // Predicated region
        $region73: #{tpu_custom_call.1} parent=47 // pred_check
          %p957 = pneg %p204
        $region74: #{tpu_custom_call.1} parent=47 // pred_check_branch
          %959 = sbr.rel (%p957) target = $region76
        $region75: #{tpu_custom_call.1} parent=47 // pred_region
          %961 = vsyncadd %s953, 0
          %s962 = smul.addr %s29, 8
          %s963 = scalar_lea.hbm %s7, %s962
          %s965 = sshll.u32 %s956, 4
          %s966 = int_to_ptr.vmem [resolvable:$true] %s965
          %s967 = sshll.u32 %s963, 4
          %s968 = int_to_ptr.hbm [resolvable:$true] %s967
          %970 = dma.vmem_to_hbm [thread:$0]  %s966, 128, %s968, %s953
        $region76: #{tpu_custom_call.1} parent=47 // pred_fallthru
          _
      $region48: #{tpu_custom_call.1} parent=5 // pred_fallthru
        _
      %p971 = scmp.le.s32.totalorder 2, %s24
      // Predicated region
      $region77: #{tpu_custom_call.1} parent=5 // pred_check
        %p972 = pneg %p971
      $region78: #{tpu_custom_call.1} parent=5 // pred_check_branch
        %974 = sbr.rel (%p972) target = $region80
      $region79: #{tpu_custom_call.1} parent=5 // pred_region
        %s975 = ssub.s32 %s24, 2
        // Predicated region
        $region81: #{tpu_custom_call.1} parent=79 // pred_check
          %p976 = pneg %p210
        $region82: #{tpu_custom_call.1} parent=79 // pred_check_branch
          %978 = sbr.rel (%p976) target = $region84
        $region83: #{tpu_custom_call.1} parent=79 // pred_region
          %s979 = sand.u32 %s195, 1
          %s980 = scalar_lea.sflag [#allocation4], %s979
          %s981 = sand.u32 %s195, 1
          %s982 = smul.addr %s981, 8
          %s983 = scalar_lea.vmem [#allocation13], %s982
          %985 = dma.done %s980, 128
        $region84: #{tpu_custom_call.1} parent=79 // pred_fallthru
          _
      $region80: #{tpu_custom_call.1} parent=5 // pred_fallthru
        _
    $region6: #{tpu_custom_call.1} parent=1 // loop_footer
      %s28 = sadd.s32 1, %s24
    $region7: #{tpu_custom_call.1} parent=1 // loop_footer_branch
      %23 = sbr.rel target = $region3
    $region8: #{tpu_custom_call.1} parent=1 // loop_exit
      _
    %986 = vsyncpa [#allocation3], 1
    %s987 = scalar_lea.sflag [#allocation3], 1
    %988 = vsyncpa %s987, 1
    %989 = vsyncpa [#allocation6], 1
    %s990 = scalar_lea.sflag [#allocation6], 1
    %991 = vsyncpa %s990, 1
    %992 = vsyncpa [#allocation9], 1
    %993 = vsyncpa [#allocation12], 1
    %994 = vsyncpa [#allocation4], 1
    %s995 = scalar_lea.sflag [#allocation4], 1
    %996 = vsyncpa %s995, 1

</llo_original>
